<compile_context>
chip_gen: v5e
topology: v5e:2x2
jax: 0.10.0
libtpu: 0.0.40
codegen_flags: <defaults>
</compile_context>

<pallas_src>
import math
import jax
import jax.numpy as jnp
from jax.experimental import pallas as pl
from jax.experimental.pallas import tpu as pltpu


LANE = 128   # TPU lane width (last-dim tiling unit)


def mlp_kernel(x_ref, w1_ref, b1_ref, w2_ref, b2_ref, w3_ref, b3_ref, o_ref):
    # x arrives f32 straight from HBM (no wrapper pad/cast pass); cast to bf16
    # in-register for the MXU.  Accumulate in f32, add f32 bias, ReLU, chain.
    x = x_ref[...].astype(jnp.bfloat16)                                # (TB, 784)
    h1 = jnp.dot(x, w1_ref[...], preferred_element_type=jnp.float32) + b1_ref[...]
    h1 = jnp.maximum(h1, 0.0).astype(jnp.bfloat16)                     # (TB, 256)
    h2 = jnp.dot(h1, w2_ref[...], preferred_element_type=jnp.float32) + b2_ref[...]
    h2 = jnp.maximum(h2, 0.0).astype(jnp.bfloat16)                     # (TB, 512)
    logits = jnp.dot(h2, w3_ref[...], preferred_element_type=jnp.float32) + b3_ref[...]
    o_ref[...] = logits.astype(jnp.bfloat16)                           # (TB, 128)


def _ceil_to(x, m):
    return (x + m - 1) // m * m


def _pad2d(a, rows, cols):
    r, c = a.shape
    if r == rows and c == cols:
        return a
    return jnp.pad(a, ((0, rows - r), (0, cols - c)))


def _choose_tb(n):
    """Batch tile: big enough to amortize per-step overhead, but keep >=2 grid
    steps when the batch allows (v7x 2-TC split), and always a multiple of 8."""
    if n <= 256:
        return _ceil_to(max(n, 8), 8)        # single step for small batches
    if -(-n // 512) < 2:                     # 512-row tile would give 1 step
        return 256
    return 512


def model_7_forward(x_nchw, params):
    """x_nchw: [N, C, H, W] float32.  Returns logits [N, 10] float32."""
    n = x_nchw.shape[0]
    x = x_nchw.reshape(n, -1).astype(jnp.float32)   # == val.view(val.size(0), -1)
    w1, b1, w2, b2, w3, b3 = params

    d_in = x.shape[1]                     # 784 (kept unpadded: full-dim block)
    d_h1_p = _ceil_to(w1.shape[1], LANE)  # 200 -> 256
    d_h2_p = _ceil_to(w2.shape[1], LANE)  # 400 -> 512
    d_out = w3.shape[1]                   # 10
    d_out_p = _ceil_to(d_out, LANE)       # 128

    tb = _choose_tb(n)
    n_p = _ceil_to(n, tb)

    # Only the batch dim of x may need padding; feature pad/cast is in-kernel,
    # so x HBM traffic is a single f32 read instead of read+write+re-read.
    xp = x if n_p == n else jnp.pad(x, ((0, n_p - n), (0, 0)))

    # Weights are tiny (~240K params): pad hidden/out dims to lane multiples
    # (zero rows/cols are mathematically inert: ReLU(0)=0, zero cols add 0)
    # and cast to bf16 once.  fc1's contraction dim stays 784.
    w1p = _pad2d(w1, d_in, d_h1_p).astype(jnp.bfloat16)
    w2p = _pad2d(w2, d_h1_p, d_h2_p).astype(jnp.bfloat16)
    w3p = _pad2d(w3, d_h2_p, d_out_p).astype(jnp.bfloat16)
    b1p = _pad2d(b1, 1, d_h1_p)
    b2p = _pad2d(b2, 1, d_h2_p)
    b3p = _pad2d(b3, 1, d_out_p)

    grid = (n_p // tb,)
    batch_tile = lambda r, c: pl.BlockSpec((r, c), lambda i: (i, 0))
    resident = lambda r, c: pl.BlockSpec((r, c), lambda i: (0, 0))

    # Advisory cost estimate using the shapes/dtypes actually DMA'd.
    flops = 2 * n_p * (d_in * d_h1_p + d_h1_p * d_h2_p + d_h2_p * d_out_p)
    bytes_accessed = (
        4 * n_p * d_in                                  # f32 x in
        + 2 * n_p * d_out_p                             # bf16 logits out
        + 2 * (w1p.size + w2p.size + w3p.size)          # bf16 weights
        + 4 * (b1p.size + b2p.size + b3p.size)          # f32 biases
    )

    out = pl.pallas_call(
        mlp_kernel,
        out_shape=jax.ShapeDtypeStruct((n_p, d_out_p), jnp.bfloat16),
        grid=grid,
        in_specs=[
            batch_tile(tb, d_in),
            resident(d_in, d_h1_p), resident(1, d_h1_p),
            resident(d_h1_p, d_h2_p), resident(1, d_h2_p),
            resident(d_h2_p, d_out_p), resident(1, d_out_p),
        ],
        out_specs=batch_tile(tb, d_out_p),
        compiler_params=pltpu.CompilerParams(
            dimension_semantics=("parallel",),
        ),
        cost_estimate=pl.CostEstimate(
            flops=flops, transcendentals=0, bytes_accessed=bytes_accessed),
    )(xp, w1p, b1p, w2p, b2p, w3p, b3p)

    return out[:n, :d_out].astype(jnp.float32)


def init_params(key):
    """Deterministic init mimicking nn.Linear's default U(-1/sqrt(fan_in), +)."""
    dims = [(784, 200), (200, 400), (400, 10)]
    params = []
    for i, (fan_in, fan_out) in enumerate(dims):
        kw, kb = jax.random.split(jax.random.fold_in(key, i))
        bound = 1.0 / math.sqrt(fan_in)
        # Stored as [in, out] so the kernel computes x @ W (PyTorch is x @ W.T
        # with W shaped [out, in] — same math, pre-transposed here).
        w = jax.random.uniform(kw, (fan_in, fan_out), jnp.float32, -bound, bound)
        b = jax.random.uniform(kb, (1, fan_out), jnp.float32, -bound, bound)
        params += [w, b]
    return tuple(params)


def reference_forward_f32(x_nchw, params):
    n = x_nchw.shape[0]
    x = x_nchw.reshape(n, -1)
    w1, b1, w2, b2, w3, b3 = params
    h1 = jnp.maximum(x @ w1 + b1, 0.0)
    h2 = jnp.maximum(h1 @ w2 + b2, 0.0)
    return h2 @ w3 + b3


def reference_forward_bf16(x_nchw, params):
    """Same bf16-in / f32-accumulate recipe the kernel uses (f32 logits)."""
    n = x_nchw.shape[0]
    x = x_nchw.reshape(n, -1).astype(jnp.bfloat16)
    w1, b1, w2, b2, w3, b3 = params
    h1 = jnp.dot(x, w1.astype(jnp.bfloat16),
                 preferred_element_type=jnp.float32) + b1
    h1 = jnp.maximum(h1, 0.0).astype(jnp.bfloat16)
    h2 = jnp.dot(h1, w2.astype(jnp.bfloat16),
                 preferred_element_type=jnp.float32) + b2
    h2 = jnp.maximum(h2, 0.0).astype(jnp.bfloat16)
    return jnp.dot(h2, w3.astype(jnp.bfloat16),
                   preferred_element_type=jnp.float32) + b3


if __name__ == "__main__":
    key = jax.random.PRNGKey(0)
    k_x, k_p = jax.random.split(key)

    # Small MNIST-like batch: [batch=8, channels=1, 28, 28] -> flattens to 784.
    x = jax.random.normal(k_x, (8, 1, 28, 28), dtype=jnp.float32)
    params = init_params(k_p)

    out = model_7_forward(x, params)
    out = jax.block_until_ready(out)
    assert out.shape == (8, 10)
    assert out.dtype == jnp.float32

    # Exact-recipe reference (bf16 matmul inputs, f32 acc), quantized to bf16
    # exactly as the kernel emits logits: near-tight tolerance.
    ref_bf16 = reference_forward_bf16(x, params)
    ref_bf16_q = ref_bf16.astype(jnp.bfloat16).astype(jnp.float32)
    assert jnp.allclose(out, ref_bf16_q, atol=1e-2, rtol=1e-2)

    # Pure-f32 reference: loose tolerance accounting for bf16 quantization.
    ref_f32 = reference_forward_f32(x, params)
    assert jnp.allclose(out, ref_f32, atol=3e-2, rtol=3e-2)

    print("KERNEL_OK")
</pallas_src>

<mosaic_0001>
module attributes {stable_mosaic.version = 11 : i64} {
  func.func @mlp_kernel(%arg0: i32, %arg1: memref<8x784xf32, #tpu.memory_space<vmem>>, %arg2: memref<784x256xbf16, #tpu.memory_space<vmem>>, %arg3: memref<1x256xf32, #tpu.memory_space<vmem>>, %arg4: memref<256x512xbf16, #tpu.memory_space<vmem>>, %arg5: memref<1x512xf32, #tpu.memory_space<vmem>>, %arg6: memref<512x128xbf16, #tpu.memory_space<vmem>>, %arg7: memref<1x128xf32, #tpu.memory_space<vmem>>, %arg8: memref<8x128xbf16, #tpu.memory_space<vmem>>) attributes {dimension_semantics = [#tpu.dimension_semantics<parallel>], iteration_bounds = array<i64: 1>, scalar_prefetch = 0 : i64, scratch_operands = 0 : i64, tpu.core_type = #tpu.core_type<tc>, window_params = [{transform_indices = @transform_0, window_bounds = array<i64: 8, 784>}, {pipeline_mode = #tpu.pipeline_mode<synchronous>, transform_indices = @transform_1, window_bounds = array<i64: 784, 256>}, {pipeline_mode = #tpu.pipeline_mode<synchronous>, transform_indices = @transform_2, window_bounds = array<i64: 1, 256>}, {pipeline_mode = #tpu.pipeline_mode<synchronous>, transform_indices = @transform_3, window_bounds = array<i64: 256, 512>}, {pipeline_mode = #tpu.pipeline_mode<synchronous>, transform_indices = @transform_4, window_bounds = array<i64: 1, 512>}, {pipeline_mode = #tpu.pipeline_mode<synchronous>, transform_indices = @transform_5, window_bounds = array<i64: 512, 128>}, {pipeline_mode = #tpu.pipeline_mode<synchronous>, transform_indices = @transform_6, window_bounds = array<i64: 1, 128>}, {transform_indices = @transform_7, window_bounds = array<i64: 8, 128>}]} {
    %c0 = arith.constant 0 : index
    %c0_0 = arith.constant 0 : index
    %0 = vector.load %arg1[%c0, %c0_0] : memref<8x784xf32, #tpu.memory_space<vmem>>, vector<8x784xf32>
    %1 = arith.truncf %0 : vector<8x784xf32> to vector<8x784xbf16>
    %c0_1 = arith.constant 0 : index
    %c0_2 = arith.constant 0 : index
    %2 = vector.load %arg2[%c0_1, %c0_2] : memref<784x256xbf16, #tpu.memory_space<vmem>>, vector<784x256xbf16>
    %cst = arith.constant dense<0.000000e+00> : vector<8x256xf32>
    %3 = tpu.matmul %1, %2, %cst {dimension_numbers = #tpu.dot_dimension_numbers<[1], [0], [0], [1], [0, 0, 1, 1], [], []>} : vector<8x784xbf16>, vector<784x256xbf16>, vector<8x256xf32> -> vector<8x256xf32>
    %c0_3 = arith.constant 0 : index
    %c0_4 = arith.constant 0 : index
    %4 = vector.load %arg3[%c0_3, %c0_4] : memref<1x256xf32, #tpu.memory_space<vmem>>, vector<1x256xf32>
    %5 = vector.broadcast %4 : vector<1x256xf32> to vector<8x256xf32>
    %6 = arith.addf %3, %5 : vector<8x256xf32>
    %cst_5 = arith.constant 0.000000e+00 : f32
    %7 = vector.broadcast %cst_5 : f32 to vector<8x256xf32>
    %8 = arith.maximumf %6, %7 : vector<8x256xf32>
    %9 = arith.truncf %8 : vector<8x256xf32> to vector<8x256xbf16>
    %c0_6 = arith.constant 0 : index
    %c0_7 = arith.constant 0 : index
    %10 = vector.load %arg4[%c0_6, %c0_7] : memref<256x512xbf16, #tpu.memory_space<vmem>>, vector<256x512xbf16>
    %cst_8 = arith.constant dense<0.000000e+00> : vector<8x512xf32>
    %11 = tpu.matmul %9, %10, %cst_8 {dimension_numbers = #tpu.dot_dimension_numbers<[1], [0], [0], [1], [0, 0, 1, 1], [], []>} : vector<8x256xbf16>, vector<256x512xbf16>, vector<8x512xf32> -> vector<8x512xf32>
    %c0_9 = arith.constant 0 : index
    %c0_10 = arith.constant 0 : index
    %12 = vector.load %arg5[%c0_9, %c0_10] : memref<1x512xf32, #tpu.memory_space<vmem>>, vector<1x512xf32>
    %13 = vector.broadcast %12 : vector<1x512xf32> to vector<8x512xf32>
    %14 = arith.addf %11, %13 : vector<8x512xf32>
    %cst_11 = arith.constant 0.000000e+00 : f32
    %15 = vector.broadcast %cst_11 : f32 to vector<8x512xf32>
    %16 = arith.maximumf %14, %15 : vector<8x512xf32>
    %17 = arith.truncf %16 : vector<8x512xf32> to vector<8x512xbf16>
    %c0_12 = arith.constant 0 : index
    %c0_13 = arith.constant 0 : index
    %18 = vector.load %arg6[%c0_12, %c0_13] : memref<512x128xbf16, #tpu.memory_space<vmem>>, vector<512x128xbf16>
    %cst_14 = arith.constant dense<0.000000e+00> : vector<8x128xf32>
    %19 = tpu.matmul %17, %18, %cst_14 {dimension_numbers = #tpu.dot_dimension_numbers<[1], [0], [0], [1], [0, 0, 1, 1], [], []>} : vector<8x512xbf16>, vector<512x128xbf16>, vector<8x128xf32> -> vector<8x128xf32>
    %c0_15 = arith.constant 0 : index
    %c0_16 = arith.constant 0 : index
    %20 = vector.load %arg7[%c0_15, %c0_16] : memref<1x128xf32, #tpu.memory_space<vmem>>, vector<1x128xf32>
    %21 = vector.broadcast %20 : vector<1x128xf32> to vector<8x128xf32>
    %22 = arith.addf %19, %21 : vector<8x128xf32>
    %23 = arith.truncf %22 : vector<8x128xf32> to vector<8x128xbf16>
    %c0_17 = arith.constant 0 : index
    %c0_18 = arith.constant 0 : index
    %24 = vector.load %arg8[%c0_17, %c0_18] : memref<8x128xbf16, #tpu.memory_space<vmem>>, vector<8x128xbf16>
    tpu.vector_store %arg8[%c0_17, %c0_18], %23 {strides = array<i32>} : memref<8x128xbf16, #tpu.memory_space<vmem>>, vector<8x128xbf16>,
    return
  }
  func.func @transform_0(%arg0: i32) -> (i32, i32) {
    %c0_i32 = arith.constant 0 : i32
    %c0_i32_0 = arith.constant 0 : i32
    return %arg0, %c0_i32 : i32, i32
  }
  func.func @transform_1(%arg0: i32) -> (i32, i32) {
    %c0_i32 = arith.constant 0 : i32
    %c0_i32_0 = arith.constant 0 : i32
    %c0_i32_1 = arith.constant 0 : i32
    return %c0_i32, %c0_i32_0 : i32, i32
  }
  func.func @transform_2(%arg0: i32) -> (i32, i32) {
    %c0_i32 = arith.constant 0 : i32
    %c0_i32_0 = arith.constant 0 : i32
    %c0_i32_1 = arith.constant 0 : i32
    return %c0_i32, %c0_i32_0 : i32, i32
  }
  func.func @transform_3(%arg0: i32) -> (i32, i32) {
    %c0_i32 = arith.constant 0 : i32
    %c0_i32_0 = arith.constant 0 : i32
    %c0_i32_1 = arith.constant 0 : i32
    return %c0_i32, %c0_i32_0 : i32, i32
  }
  func.func @transform_4(%arg0: i32) -> (i32, i32) {
    %c0_i32 = arith.constant 0 : i32
    %c0_i32_0 = arith.constant 0 : i32
    %c0_i32_1 = arith.constant 0 : i32
    return %c0_i32, %c0_i32_0 : i32, i32
  }
  func.func @transform_5(%arg0: i32) -> (i32, i32) {
    %c0_i32 = arith.constant 0 : i32
    %c0_i32_0 = arith.constant 0 : i32
    %c0_i32_1 = arith.constant 0 : i32
    return %c0_i32, %c0_i32_0 : i32, i32
  }
  func.func @transform_6(%arg0: i32) -> (i32, i32) {
    %c0_i32 = arith.constant 0 : i32
    %c0_i32_0 = arith.constant 0 : i32
    %c0_i32_1 = arith.constant 0 : i32
    return %c0_i32, %c0_i32_0 : i32, i32
  }
  func.func @transform_7(%arg0: i32) -> (i32, i32) {
    %c0_i32 = arith.constant 0 : i32
    %c0_i32_0 = arith.constant 0 : i32
    return %arg0, %c0_i32 : i32, i32
  }
}

</mosaic_0001>

<llo_original>
// kernel: tpu_custom_call.1
$region0: #{tpu_custom_call.1}
  #allocation0 [shape = 'u32[]', space=smem, size = 0x4, offset = 0x4, fixed_abs, tag = 'smem constant byte address 0x4 - core index']
  #allocation1 [shape = 'u32[72,128]{1,0:T(1,128)}', space=vmem, size = 0x9000, scoped, tag = 'internal scratch']
  %s0 = inlined_call_operand.hbm [shape: f32[8,784], index: 0, kind: input, shape index: {}]
  %s1 = inlined_call_operand.hbm [shape: bf16[784,256], index: 1, kind: input, shape index: {}]
  %s2 = inlined_call_operand.hbm [shape: f32[1,256], index: 2, kind: input, shape index: {}]
  %s3 = inlined_call_operand.hbm [shape: bf16[256,512], index: 3, kind: input, shape index: {}]
  %s4 = inlined_call_operand.hbm [shape: f32[1,512], index: 4, kind: input, shape index: {}]
  %s5 = inlined_call_operand.hbm [shape: bf16[512,128], index: 5, kind: input, shape index: {}]
  %s6 = inlined_call_operand.vmem [shape: f32[1,128], index: 6, kind: input, shape index: {}]
  %s7 = inlined_call_operand.hbm [shape: bf16[8,128], index: 7, kind: output, shape index: {}]
  %s8 = sld [smem:[#allocation0]]
  $region62: #{tpu_custom_call.1} parent=0
    _
  %s10 = ssub.s32 1, %s8
  %s11 = scalar_select 0, %s10, %s8
  $region1: #{tpu_custom_call.1} parent=0
    #allocation2 [shape = 'u8[28672]{0}', space=vmem, size = 0x7000, scoped, tag = 'input window, operand 0, single buffered']
    #allocation3 [shape = 's32[1]{0}', space=sflag, size = 0x4, scoped, tag = 'scoped memory for tpu_custom_call.1']
    #allocation4 [shape = 's32[1]{0}', space=sflag, size = 0x4, scoped, tag = 'scoped memory for tpu_custom_call.1']
    #allocation5 [shape = 'u8[401408]{0}', space=vmem, size = 0x62000, scoped, tag = 'input window, operand 1, single buffered']
    #allocation6 [shape = 's32[1]{0}', space=sflag, size = 0x4, scoped, tag = 'scoped memory for tpu_custom_call.1']
    #allocation7 [shape = 'u8[1024]{0}', space=vmem, size = 0x400, scoped, tag = 'input window, operand 2, single buffered']
    #allocation8 [shape = 'u8[262144]{0}', space=vmem, size = 0x40000, scoped, tag = 'input window, operand 3, single buffered']
    #allocation9 [shape = 's32[1]{0}', space=sflag, size = 0x4, scoped, tag = 'scoped memory for tpu_custom_call.1']
    #allocation10 [shape = 'u8[2048]{0}', space=vmem, size = 0x800, scoped, tag = 'input window, operand 4, single buffered']
    #allocation11 [shape = 'u8[131072]{0}', space=vmem, size = 0x20000, scoped, tag = 'input window, operand 5, single buffered']
    #allocation12 [shape = 's32[1]{0}', space=sflag, size = 0x4, scoped, tag = 'scoped memory for tpu_custom_call.1']
    #allocation13 [shape = 'u8[2048]{0}', space=vmem, size = 0x800, scoped, tag = 'output window, operand 0, single buffered']
    %12 = vsyncpa [#allocation3], 0
    %13 = vsyncpa [#allocation6], 0
    %14 = vsyncpa [#allocation9], 0
    %15 = vsyncpa [#allocation12], 0
    %16 = vsyncpa [#allocation4], 0
    // Predicated region
    $region2: #{tpu_custom_call.1} parent=1 // pred_check
      _
    $region3: #{tpu_custom_call.1} parent=1 // pred_check_branch
      %18 = sbr.rel (0) target = $region5
    $region4: #{tpu_custom_call.1} parent=1 // pred_region
      %20 = vsyncadd [#allocation3], 0
      %s22 = sshll.u32 %s0, 4
      %s23 = int_to_ptr.hbm [resolvable:$true] %s22
      %s24 = sshll.u32 [#allocation2], 4
      %s25 = int_to_ptr.vmem [resolvable:$true] %s24
      %27 = dma.hbm_to_vmem [thread:$0]  %s23, 896, %s25, [#allocation3]
    $region5: #{tpu_custom_call.1} parent=1 // pred_fallthru
      _
    // Predicated region
    $region6: #{tpu_custom_call.1} parent=1 // pred_check
      _
    $region7: #{tpu_custom_call.1} parent=1 // pred_check_branch
      %29 = sbr.rel (0) target = $region9
    $region8: #{tpu_custom_call.1} parent=1 // pred_region
      %31 = vsyncadd [#allocation6], 0
      %s32 = sshll.u32 %s1, 4
      %s33 = int_to_ptr.hbm [resolvable:$true] %s32
      %s34 = sshll.u32 [#allocation5], 4
      %s35 = int_to_ptr.vmem [resolvable:$true] %s34
      %40 = dma.hbm_to_vmem [thread:$0]  %s33, 12544, %s35, [#allocation6], 128, 128, 8
    $region9: #{tpu_custom_call.1} parent=1 // pred_fallthru
      _
    // Predicated region
    $region10: #{tpu_custom_call.1} parent=1 // pred_check
      _
    $region11: #{tpu_custom_call.1} parent=1 // pred_check_branch
      %42 = sbr.rel (0) target = $region13
    $region12: #{tpu_custom_call.1} parent=1 // pred_region
      %44 = vsyncadd [#allocation6], 0
      %s46 = sshll.u32 %s2, 4
      %s47 = int_to_ptr.hbm [resolvable:$true] %s46
      %s48 = sshll.u32 [#allocation7], 4
      %s49 = int_to_ptr.vmem [resolvable:$true] %s48
      %51 = dma.hbm_to_vmem [thread:$0]  %s47, 32, %s49, [#allocation6]
    $region13: #{tpu_custom_call.1} parent=1 // pred_fallthru
      _
    // Predicated region
    $region14: #{tpu_custom_call.1} parent=1 // pred_check
      _
    $region15: #{tpu_custom_call.1} parent=1 // pred_check_branch
      %53 = sbr.rel (0) target = $region17
    $region16: #{tpu_custom_call.1} parent=1 // pred_region
      %55 = vsyncadd [#allocation9], 0
      %s56 = sshll.u32 %s3, 4
      %s57 = int_to_ptr.hbm [resolvable:$true] %s56
      %s58 = sshll.u32 [#allocation8], 4
      %s59 = int_to_ptr.vmem [resolvable:$true] %s58
      %64 = dma.hbm_to_vmem [thread:$0]  %s57, 8192, %s59, [#allocation9], 256, 256, 16
    $region17: #{tpu_custom_call.1} parent=1 // pred_fallthru
      _
    // Predicated region
    $region18: #{tpu_custom_call.1} parent=1 // pred_check
      _
    $region19: #{tpu_custom_call.1} parent=1 // pred_check_branch
      %66 = sbr.rel (0) target = $region21
    $region20: #{tpu_custom_call.1} parent=1 // pred_region
      %68 = vsyncadd [#allocation9], 0
      %s70 = sshll.u32 %s4, 4
      %s71 = int_to_ptr.hbm [resolvable:$true] %s70
      %s72 = sshll.u32 [#allocation10], 4
      %s73 = int_to_ptr.vmem [resolvable:$true] %s72
      %75 = dma.hbm_to_vmem [thread:$0]  %s71, 64, %s73, [#allocation9]
    $region21: #{tpu_custom_call.1} parent=1 // pred_fallthru
      _
    // Predicated region
    $region22: #{tpu_custom_call.1} parent=1 // pred_check
      _
    $region23: #{tpu_custom_call.1} parent=1 // pred_check_branch
      %77 = sbr.rel (0) target = $region25
    $region24: #{tpu_custom_call.1} parent=1 // pred_region
      %79 = vsyncadd [#allocation12], 0
      %s80 = sshll.u32 %s5, 4
      %s81 = int_to_ptr.hbm [resolvable:$true] %s80
      %s82 = sshll.u32 [#allocation11], 4
      %s83 = int_to_ptr.vmem [resolvable:$true] %s82
      %88 = dma.hbm_to_vmem [thread:$0]  %s81, 4096, %s83, [#allocation12], 64, 64, 4
    $region25: #{tpu_custom_call.1} parent=1 // pred_fallthru
      _
    // Predicated region
    $region26: #{tpu_custom_call.1} parent=1 // pred_check
      _
    $region27: #{tpu_custom_call.1} parent=1 // pred_check_branch
      %90 = sbr.rel (0) target = $region29
    $region28: #{tpu_custom_call.1} parent=1 // pred_region
      _
    $region29: #{tpu_custom_call.1} parent=1 // pred_fallthru
      _
    // Predicated region
    $region30: #{tpu_custom_call.1} parent=1 // pred_check
      _
    $region31: #{tpu_custom_call.1} parent=1 // pred_check_branch
      %92 = sbr.rel (0) target = $region33
    $region32: #{tpu_custom_call.1} parent=1 // pred_region
      %94 = dma.done [#allocation3], 896
    $region33: #{tpu_custom_call.1} parent=1 // pred_fallthru
      _
    // Predicated region
    $region34: #{tpu_custom_call.1} parent=1 // pred_check
      _
    $region35: #{tpu_custom_call.1} parent=1 // pred_check_branch
      %96 = sbr.rel (0) target = $region37
    $region36: #{tpu_custom_call.1} parent=1 // pred_region
      %98 = dma.done [#allocation6], 12544
    $region37: #{tpu_custom_call.1} parent=1 // pred_fallthru
      _
    // Predicated region
    $region38: #{tpu_custom_call.1} parent=1 // pred_check
      _
    $region39: #{tpu_custom_call.1} parent=1 // pred_check_branch
      %100 = sbr.rel (0) target = $region41
    $region40: #{tpu_custom_call.1} parent=1 // pred_region
      %102 = dma.done [#allocation6], 32
    $region41: #{tpu_custom_call.1} parent=1 // pred_fallthru
      _
    // Predicated region
    $region42: #{tpu_custom_call.1} parent=1 // pred_check
      _
    $region43: #{tpu_custom_call.1} parent=1 // pred_check_branch
      %104 = sbr.rel (0) target = $region45
    $region44: #{tpu_custom_call.1} parent=1 // pred_region
      %106 = dma.done [#allocation9], 8192
    $region45: #{tpu_custom_call.1} parent=1 // pred_fallthru
      _
    // Predicated region
    $region46: #{tpu_custom_call.1} parent=1 // pred_check
      _
    $region47: #{tpu_custom_call.1} parent=1 // pred_check_branch
      %108 = sbr.rel (0) target = $region49
    $region48: #{tpu_custom_call.1} parent=1 // pred_region
      %110 = dma.done [#allocation9], 64
    $region49: #{tpu_custom_call.1} parent=1 // pred_fallthru
      _
    // Predicated region
    $region50: #{tpu_custom_call.1} parent=1 // pred_check
      _
    $region51: #{tpu_custom_call.1} parent=1 // pred_check_branch
      %112 = sbr.rel (0) target = $region53
    $region52: #{tpu_custom_call.1} parent=1 // pred_region
      %114 = dma.done [#allocation12], 4096
    $region53: #{tpu_custom_call.1} parent=1 // pred_fallthru
      _
    %v116 = vld [vmem:[#allocation2] sm:$0xff]
    %v117 = vld [vmem:[#allocation2 + $0x8] sm:$0xff]
    %v118 = vld [vmem:[#allocation2 + $0x10] sm:$0xff]
    %v119 = vld [vmem:[#allocation2 + $0x18] sm:$0xff]
    %v120 = vld [vmem:[#allocation2 + $0x20] sm:$0xff]
    %v121 = vld [vmem:[#allocation2 + $0x28] sm:$0xff]
    %v122 = vld [vmem:[#allocation2 + $0x30] sm:$0xff]
    %v123 = vpack.c.bf16 %v116, %v116
    %v124 = vpack.c.bf16 %v117, %v117
    %v125 = vpack.c.bf16 %v118, %v118
    %v126 = vpack.c.bf16 %v119, %v119
    %v127 = vpack.c.bf16 %v120, %v120
    %v128 = vpack.c.bf16 %v121, %v121
    %v129 = vpack.c.bf16 %v122, %v122
    %v130 = vld [vmem:[#allocation5] sm:$0xff]
    %v131 = vld [vmem:[#allocation5 + $0x8] sm:$0xff]
    %v132 = vld [vmem:[#allocation5 + $0x10] sm:$0xff]
    %v133 = vld [vmem:[#allocation5 + $0x18] sm:$0xff]
    %v134 = vld [vmem:[#allocation5 + $0x20] sm:$0xff]
    %v135 = vld [vmem:[#allocation5 + $0x28] sm:$0xff]
    %v136 = vld [vmem:[#allocation5 + $0x30] sm:$0xff]
    %v137 = vld [vmem:[#allocation5 + $0x38] sm:$0xff]
    %v138 = vld [vmem:[#allocation5 + $0x40] sm:$0xff]
    %v139 = vld [vmem:[#allocation5 + $0x48] sm:$0xff]
    %v140 = vld [vmem:[#allocation5 + $0x50] sm:$0xff]
    %v141 = vld [vmem:[#allocation5 + $0x58] sm:$0xff]
    %v142 = vld [vmem:[#allocation5 + $0x60] sm:$0xff]
    %v143 = vld [vmem:[#allocation5 + $0x68] sm:$0xff]
    %v144 = vld [vmem:[#allocation5 + $0x70] sm:$0xff]
    %v145 = vld [vmem:[#allocation5 + $0x78] sm:$0xff]
    %v146 = vld [vmem:[#allocation5 + $0x80] sm:$0xff]
    %v147 = vld [vmem:[#allocation5 + $0x88] sm:$0xff]
    %v148 = vld [vmem:[#allocation5 + $0x90] sm:$0xff]
    %v149 = vld [vmem:[#allocation5 + $0x98] sm:$0xff]
    %v150 = vld [vmem:[#allocation5 + $0xa0] sm:$0xff]
    %v151 = vld [vmem:[#allocation5 + $0xa8] sm:$0xff]
    %v152 = vld [vmem:[#allocation5 + $0xb0] sm:$0xff]
    %v153 = vld [vmem:[#allocation5 + $0xb8] sm:$0xff]
    %v154 = vld [vmem:[#allocation5 + $0xc0] sm:$0xff]
    %v155 = vld [vmem:[#allocation5 + $0xc8] sm:$0xff]
    %v156 = vld [vmem:[#allocation5 + $0xd0] sm:$0xff]
    %v157 = vld [vmem:[#allocation5 + $0xd8] sm:$0xff]
    %v158 = vld [vmem:[#allocation5 + $0xe0] sm:$0xff]
    %v159 = vld [vmem:[#allocation5 + $0xe8] sm:$0xff]
    %v160 = vld [vmem:[#allocation5 + $0xf0] sm:$0xff]
    %v161 = vld [vmem:[#allocation5 + $0xf8] sm:$0xff]
    %v162 = vld [vmem:[#allocation5 + $0x100] sm:$0xff]
    %v163 = vld [vmem:[#allocation5 + $0x108] sm:$0xff]
    %v164 = vld [vmem:[#allocation5 + $0x110] sm:$0xff]
    %v165 = vld [vmem:[#allocation5 + $0x118] sm:$0xff]
    %v166 = vld [vmem:[#allocation5 + $0x120] sm:$0xff]
    %v167 = vld [vmem:[#allocation5 + $0x128] sm:$0xff]
    %v168 = vld [vmem:[#allocation5 + $0x130] sm:$0xff]
    %v169 = vld [vmem:[#allocation5 + $0x138] sm:$0xff]
    %v170 = vld [vmem:[#allocation5 + $0x140] sm:$0xff]
    %v171 = vld [vmem:[#allocation5 + $0x148] sm:$0xff]
    %v172 = vld [vmem:[#allocation5 + $0x150] sm:$0xff]
    %v173 = vld [vmem:[#allocation5 + $0x158] sm:$0xff]
    %v174 = vld [vmem:[#allocation5 + $0x160] sm:$0xff]
    %v175 = vld [vmem:[#allocation5 + $0x168] sm:$0xff]
    %v176 = vld [vmem:[#allocation5 + $0x170] sm:$0xff]
    %v177 = vld [vmem:[#allocation5 + $0x178] sm:$0xff]
    %v178 = vld [vmem:[#allocation5 + $0x180] sm:$0xff]
    %v179 = vld [vmem:[#allocation5 + $0x188] sm:$0xff]
    %v180 = vld [vmem:[#allocation5 + $0x190] sm:$0xff]
    %v181 = vld [vmem:[#allocation5 + $0x198] sm:$0xff]
    %v182 = vld [vmem:[#allocation5 + $0x1a0] sm:$0xff]
    %v183 = vld [vmem:[#allocation5 + $0x1a8] sm:$0xff]
    %v184 = vld [vmem:[#allocation5 + $0x1b0] sm:$0xff]
    %v185 = vld [vmem:[#allocation5 + $0x1b8] sm:$0xff]
    %v186 = vld [vmem:[#allocation5 + $0x1c0] sm:$0xff]
    %v187 = vld [vmem:[#allocation5 + $0x1c8] sm:$0xff]
    %v188 = vld [vmem:[#allocation5 + $0x1d0] sm:$0xff]
    %v189 = vld [vmem:[#allocation5 + $0x1d8] sm:$0xff]
    %v190 = vld [vmem:[#allocation5 + $0x1e0] sm:$0xff]
    %v191 = vld [vmem:[#allocation5 + $0x1e8] sm:$0xff]
    %v192 = vld [vmem:[#allocation5 + $0x1f0] sm:$0xff]
    %v193 = vld [vmem:[#allocation5 + $0x1f8] sm:$0xff]
    %v194 = vld [vmem:[#allocation5 + $0x200] sm:$0xff]
    %v195 = vld [vmem:[#allocation5 + $0x208] sm:$0xff]
    %v196 = vld [vmem:[#allocation5 + $0x210] sm:$0xff]
    %v197 = vld [vmem:[#allocation5 + $0x218] sm:$0xff]
    %v198 = vld [vmem:[#allocation5 + $0x220] sm:$0xff]
    %v199 = vld [vmem:[#allocation5 + $0x228] sm:$0xff]
    %v200 = vld [vmem:[#allocation5 + $0x230] sm:$0xff]
    %v201 = vld [vmem:[#allocation5 + $0x238] sm:$0xff]
    %v202 = vld [vmem:[#allocation5 + $0x240] sm:$0xff]
    %v203 = vld [vmem:[#allocation5 + $0x248] sm:$0xff]
    %v204 = vld [vmem:[#allocation5 + $0x250] sm:$0xff]
    %v205 = vld [vmem:[#allocation5 + $0x258] sm:$0xff]
    %v206 = vld [vmem:[#allocation5 + $0x260] sm:$0xff]
    %v207 = vld [vmem:[#allocation5 + $0x268] sm:$0xff]
    %v208 = vld [vmem:[#allocation5 + $0x270] sm:$0xff]
    %v209 = vld [vmem:[#allocation5 + $0x278] sm:$0xff]
    %v210 = vld [vmem:[#allocation5 + $0x280] sm:$0xff]
    %v211 = vld [vmem:[#allocation5 + $0x288] sm:$0xff]
    %v212 = vld [vmem:[#allocation5 + $0x290] sm:$0xff]
    %v213 = vld [vmem:[#allocation5 + $0x298] sm:$0xff]
    %v214 = vld [vmem:[#allocation5 + $0x2a0] sm:$0xff]
    %v215 = vld [vmem:[#allocation5 + $0x2a8] sm:$0xff]
    %v216 = vld [vmem:[#allocation5 + $0x2b0] sm:$0xff]
    %v217 = vld [vmem:[#allocation5 + $0x2b8] sm:$0xff]
    %v218 = vld [vmem:[#allocation5 + $0x2c0] sm:$0xff]
    %v219 = vld [vmem:[#allocation5 + $0x2c8] sm:$0xff]
    %v220 = vld [vmem:[#allocation5 + $0x2d0] sm:$0xff]
    %v221 = vld [vmem:[#allocation5 + $0x2d8] sm:$0xff]
    %v222 = vld [vmem:[#allocation5 + $0x2e0] sm:$0xff]
    %v223 = vld [vmem:[#allocation5 + $0x2e8] sm:$0xff]
    %v224 = vld [vmem:[#allocation5 + $0x2f0] sm:$0xff]
    %v225 = vld [vmem:[#allocation5 + $0x2f8] sm:$0xff]
    %v226 = vld [vmem:[#allocation5 + $0x300] sm:$0xff]
    %v227 = vld [vmem:[#allocation5 + $0x308] sm:$0xff]
    %v228 = vld [vmem:[#allocation7] sm:$0x3]
    %v230 = vperm.slane %v228, 0
    %v231 = vperm.slane %v228, 1
    %v332 = vunpack.c.l.b16 %v130
    %v333 = vunpack.c.h.b16 %v130
    %v334 = vunpack.c.l.b16 %v131
    %v335 = vunpack.c.h.b16 %v131
    %v336 = vunpack.c.l.b16 %v132
    %v337 = vunpack.c.h.b16 %v132
    %v338 = vunpack.c.l.b16 %v133
    %v339 = vunpack.c.h.b16 %v133
    %v340 = vunpack.c.l.b16 %v134
    %v341 = vunpack.c.h.b16 %v134
    %v342 = vunpack.c.l.b16 %v135
    %v343 = vunpack.c.h.b16 %v135
    %v344 = vunpack.c.l.b16 %v136
    %v345 = vunpack.c.h.b16 %v136
    %v346 = vunpack.c.l.b16 %v137
    %v347 = vunpack.c.h.b16 %v137
    %v348 = vunpack.c.l.b16 %v138
    %v349 = vunpack.c.h.b16 %v138
    %v350 = vunpack.c.l.b16 %v139
    %v351 = vunpack.c.h.b16 %v139
    %v352 = vunpack.c.l.b16 %v140
    %v353 = vunpack.c.h.b16 %v140
    %v354 = vunpack.c.l.b16 %v141
    %v355 = vunpack.c.h.b16 %v141
    %v356 = vunpack.c.l.b16 %v142
    %v357 = vunpack.c.h.b16 %v142
    %v358 = vunpack.c.l.b16 %v143
    %v359 = vunpack.c.h.b16 %v143
    %v360 = vunpack.c.l.b16 %v144
    %v361 = vunpack.c.h.b16 %v144
    %v362 = vunpack.c.l.b16 %v145
    %v363 = vunpack.c.h.b16 %v145
    %v364 = vunpack.c.l.b16 %v146
    %v365 = vunpack.c.h.b16 %v146
    %v366 = vunpack.c.l.b16 %v147
    %v367 = vunpack.c.h.b16 %v147
    %v368 = vunpack.c.l.b16 %v148
    %v369 = vunpack.c.h.b16 %v148
    %v370 = vunpack.c.l.b16 %v149
    %v371 = vunpack.c.h.b16 %v149
    %v372 = vunpack.c.l.b16 %v150
    %v373 = vunpack.c.h.b16 %v150
    %v374 = vunpack.c.l.b16 %v151
    %v375 = vunpack.c.h.b16 %v151
    %v376 = vunpack.c.l.b16 %v152
    %v377 = vunpack.c.h.b16 %v152
    %v378 = vunpack.c.l.b16 %v153
    %v379 = vunpack.c.h.b16 %v153
    %v380 = vunpack.c.l.b16 %v154
    %v381 = vunpack.c.h.b16 %v154
    %v382 = vunpack.c.l.b16 %v155
    %v383 = vunpack.c.h.b16 %v155
    %v384 = vunpack.c.l.b16 %v156
    %v385 = vunpack.c.h.b16 %v156
    %v386 = vunpack.c.l.b16 %v157
    %v387 = vunpack.c.h.b16 %v157
    %v388 = vunpack.c.l.b16 %v158
    %v389 = vunpack.c.h.b16 %v158
    %v390 = vunpack.c.l.b16 %v159
    %v391 = vunpack.c.h.b16 %v159
    %v392 = vunpack.c.l.b16 %v160
    %v393 = vunpack.c.h.b16 %v160
    %v394 = vunpack.c.l.b16 %v161
    %v395 = vunpack.c.h.b16 %v161
    %v396 = vunpack.c.l.b16 %v162
    %v397 = vunpack.c.h.b16 %v162
    %v398 = vunpack.c.l.b16 %v163
    %v399 = vunpack.c.h.b16 %v163
    %v400 = vunpack.c.l.b16 %v164
    %v401 = vunpack.c.h.b16 %v164
    %v402 = vunpack.c.l.b16 %v165
    %v403 = vunpack.c.h.b16 %v165
    %v404 = vunpack.c.l.b16 %v166
    %v405 = vunpack.c.h.b16 %v166
    %v406 = vunpack.c.l.b16 %v167
    %v407 = vunpack.c.h.b16 %v167
    %v408 = vunpack.c.l.b16 %v168
    %v409 = vunpack.c.h.b16 %v168
    %v410 = vunpack.c.l.b16 %v169
    %v411 = vunpack.c.h.b16 %v169
    %v412 = vunpack.c.l.b16 %v170
    %v413 = vunpack.c.h.b16 %v170
    %v414 = vunpack.c.l.b16 %v171
    %v415 = vunpack.c.h.b16 %v171
    %v416 = vunpack.c.l.b16 %v172
    %v417 = vunpack.c.h.b16 %v172
    %v418 = vunpack.c.l.b16 %v173
    %v419 = vunpack.c.h.b16 %v173
    %v420 = vunpack.c.l.b16 %v174
    %v421 = vunpack.c.h.b16 %v174
    %v422 = vunpack.c.l.b16 %v175
    %v423 = vunpack.c.h.b16 %v175
    %v424 = vunpack.c.l.b16 %v176
    %v425 = vunpack.c.h.b16 %v176
    %v426 = vunpack.c.l.b16 %v177
    %v427 = vunpack.c.h.b16 %v177
    %v428 = vunpack.c.l.b16 %v178
    %v429 = vunpack.c.h.b16 %v178
    %v430 = vunpack.c.l.b16 %v179
    %v431 = vunpack.c.h.b16 %v179
    %v432 = vunpack.c.l.b16 %v180
    %v433 = vunpack.c.h.b16 %v180
    %v434 = vunpack.c.l.b16 %v181
    %v435 = vunpack.c.h.b16 %v181
    %v436 = vunpack.c.l.b16 %v182
    %v437 = vunpack.c.h.b16 %v182
    %v438 = vunpack.c.l.b16 %v183
    %v439 = vunpack.c.h.b16 %v183
    %v440 = vunpack.c.l.b16 %v184
    %v441 = vunpack.c.h.b16 %v184
    %v442 = vunpack.c.l.b16 %v185
    %v443 = vunpack.c.h.b16 %v185
    %v444 = vunpack.c.l.b16 %v186
    %v445 = vunpack.c.h.b16 %v186
    %v446 = vunpack.c.l.b16 %v187
    %v447 = vunpack.c.h.b16 %v187
    %v448 = vunpack.c.l.b16 %v188
    %v449 = vunpack.c.h.b16 %v188
    %v450 = vunpack.c.l.b16 %v189
    %v451 = vunpack.c.h.b16 %v189
    %v452 = vunpack.c.l.b16 %v190
    %v453 = vunpack.c.h.b16 %v190
    %v454 = vunpack.c.l.b16 %v191
    %v455 = vunpack.c.h.b16 %v191
    %v456 = vunpack.c.l.b16 %v192
    %v457 = vunpack.c.h.b16 %v192
    %v458 = vunpack.c.l.b16 %v193
    %v459 = vunpack.c.h.b16 %v193
    %v460 = vunpack.c.l.b16 %v194
    %v461 = vunpack.c.h.b16 %v194
    %v462 = vunpack.c.l.b16 %v195
    %v463 = vunpack.c.h.b16 %v195
    %v464 = vunpack.c.l.b16 %v196
    %v465 = vunpack.c.h.b16 %v196
    %v466 = vunpack.c.l.b16 %v197
    %v467 = vunpack.c.h.b16 %v197
    %v468 = vunpack.c.l.b16 %v198
    %v469 = vunpack.c.h.b16 %v198
    %v470 = vunpack.c.l.b16 %v199
    %v471 = vunpack.c.h.b16 %v199
    %v472 = vunpack.c.l.b16 %v200
    %v473 = vunpack.c.h.b16 %v200
    %v474 = vunpack.c.l.b16 %v201
    %v475 = vunpack.c.h.b16 %v201
    %v476 = vunpack.c.l.b16 %v202
    %v477 = vunpack.c.h.b16 %v202
    %v478 = vunpack.c.l.b16 %v203
    %v479 = vunpack.c.h.b16 %v203
    %v480 = vunpack.c.l.b16 %v204
    %v481 = vunpack.c.h.b16 %v204
    %v482 = vunpack.c.l.b16 %v205
    %v483 = vunpack.c.h.b16 %v205
    %v484 = vunpack.c.l.b16 %v206
    %v485 = vunpack.c.h.b16 %v206
    %v486 = vunpack.c.l.b16 %v207
    %v487 = vunpack.c.h.b16 %v207
    %v488 = vunpack.c.l.b16 %v208
    %v489 = vunpack.c.h.b16 %v208
    %v490 = vunpack.c.l.b16 %v209
    %v491 = vunpack.c.h.b16 %v209
    %v492 = vunpack.c.l.b16 %v210
    %v493 = vunpack.c.h.b16 %v210
    %v494 = vunpack.c.l.b16 %v211
    %v495 = vunpack.c.h.b16 %v211
    %v496 = vunpack.c.l.b16 %v212
    %v497 = vunpack.c.h.b16 %v212
    %v498 = vunpack.c.l.b16 %v213
    %v499 = vunpack.c.h.b16 %v213
    %v500 = vunpack.c.l.b16 %v214
    %v501 = vunpack.c.h.b16 %v214
    %v502 = vunpack.c.l.b16 %v215
    %v503 = vunpack.c.h.b16 %v215
    %v504 = vunpack.c.l.b16 %v216
    %v505 = vunpack.c.h.b16 %v216
    %v506 = vunpack.c.l.b16 %v217
    %v507 = vunpack.c.h.b16 %v217
    %v508 = vunpack.c.l.b16 %v218
    %v509 = vunpack.c.h.b16 %v218
    %v510 = vunpack.c.l.b16 %v219
    %v511 = vunpack.c.h.b16 %v219
    %v512 = vunpack.c.l.b16 %v220
    %v513 = vunpack.c.h.b16 %v220
    %v514 = vunpack.c.l.b16 %v221
    %v515 = vunpack.c.h.b16 %v221
    %v516 = vunpack.c.l.b16 %v222
    %v517 = vunpack.c.h.b16 %v222
    %v518 = vunpack.c.l.b16 %v223
    %v519 = vunpack.c.h.b16 %v223
    %v520 = vunpack.c.l.b16 %v224
    %v521 = vunpack.c.h.b16 %v224
    %v522 = vunpack.c.l.b16 %v225
    %v523 = vunpack.c.h.b16 %v225
    %v524 = vunpack.c.l.b16 %v226
    %v525 = vunpack.c.h.b16 %v226
    %v526 = vunpack.c.l.b16 %v227
    %v527 = vunpack.c.h.b16 %v227
    %v528 = vpack.c.b16 %v334, %v332
    %v529 = vpack.c.b16 %v335, %v333
    %v530 = vpack.c.b16 %v338, %v336
    %v531 = vpack.c.b16 %v339, %v337
    %v532 = vpack.c.b16 %v342, %v340
    %v533 = vpack.c.b16 %v343, %v341
    %v534 = vpack.c.b16 %v346, %v344
    %v535 = vpack.c.b16 %v347, %v345
    %v536 = vpack.c.b16 %v350, %v348
    %v537 = vpack.c.b16 %v351, %v349
    %v538 = vpack.c.b16 %v354, %v352
    %v539 = vpack.c.b16 %v355, %v353
    %v540 = vpack.c.b16 %v358, %v356
    %v541 = vpack.c.b16 %v359, %v357
    %v542 = vpack.c.b16 %v362, %v360
    %v543 = vpack.c.b16 %v363, %v361
    %v544 = vpack.c.b16 %v366, %v364
    %v545 = vpack.c.b16 %v367, %v365
    %v546 = vpack.c.b16 %v370, %v368
    %v547 = vpack.c.b16 %v371, %v369
    %v548 = vpack.c.b16 %v374, %v372
    %v549 = vpack.c.b16 %v375, %v373
    %v550 = vpack.c.b16 %v378, %v376
    %v551 = vpack.c.b16 %v379, %v377
    %v552 = vpack.c.b16 %v382, %v380
    %v553 = vpack.c.b16 %v383, %v381
    %v554 = vpack.c.b16 %v386, %v384
    %v555 = vpack.c.b16 %v387, %v385
    %v556 = vpack.c.b16 %v390, %v388
    %v557 = vpack.c.b16 %v391, %v389
    %v558 = vpack.c.b16 %v394, %v392
    %v559 = vpack.c.b16 %v395, %v393
    %v560 = vpack.c.b16 %v398, %v396
    %v561 = vpack.c.b16 %v399, %v397
    %v562 = vpack.c.b16 %v402, %v400
    %v563 = vpack.c.b16 %v403, %v401
    %v564 = vpack.c.b16 %v406, %v404
    %v565 = vpack.c.b16 %v407, %v405
    %v566 = vpack.c.b16 %v410, %v408
    %v567 = vpack.c.b16 %v411, %v409
    %v568 = vpack.c.b16 %v414, %v412
    %v569 = vpack.c.b16 %v415, %v413
    %v570 = vpack.c.b16 %v418, %v416
    %v571 = vpack.c.b16 %v419, %v417
    %v572 = vpack.c.b16 %v422, %v420
    %v573 = vpack.c.b16 %v423, %v421
    %v574 = vpack.c.b16 %v426, %v424
    %v575 = vpack.c.b16 %v427, %v425
    %v576 = vpack.c.b16 %v430, %v428
    %v577 = vpack.c.b16 %v431, %v429
    %v578 = vpack.c.b16 %v434, %v432
    %v579 = vpack.c.b16 %v435, %v433
    %v580 = vpack.c.b16 %v438, %v436
    %v581 = vpack.c.b16 %v439, %v437
    %v582 = vpack.c.b16 %v442, %v440
    %v583 = vpack.c.b16 %v443, %v441
    %v584 = vpack.c.b16 %v446, %v444
    %v585 = vpack.c.b16 %v447, %v445
    %v586 = vpack.c.b16 %v450, %v448
    %v587 = vpack.c.b16 %v451, %v449
    %v588 = vpack.c.b16 %v454, %v452
    %v589 = vpack.c.b16 %v455, %v453
    %v590 = vpack.c.b16 %v458, %v456
    %v591 = vpack.c.b16 %v459, %v457
    %v592 = vpack.c.b16 %v462, %v460
    %v593 = vpack.c.b16 %v463, %v461
    %v594 = vpack.c.b16 %v466, %v464
    %v595 = vpack.c.b16 %v467, %v465
    %v596 = vpack.c.b16 %v470, %v468
    %v597 = vpack.c.b16 %v471, %v469
    %v598 = vpack.c.b16 %v474, %v472
    %v599 = vpack.c.b16 %v475, %v473
    %v600 = vpack.c.b16 %v478, %v476
    %v601 = vpack.c.b16 %v479, %v477
    %v602 = vpack.c.b16 %v482, %v480
    %v603 = vpack.c.b16 %v483, %v481
    %v604 = vpack.c.b16 %v486, %v484
    %v605 = vpack.c.b16 %v487, %v485
    %v606 = vpack.c.b16 %v490, %v488
    %v607 = vpack.c.b16 %v491, %v489
    %v608 = vpack.c.b16 %v494, %v492
    %v609 = vpack.c.b16 %v495, %v493
    %v610 = vpack.c.b16 %v498, %v496
    %v611 = vpack.c.b16 %v499, %v497
    %v612 = vpack.c.b16 %v502, %v500
    %v613 = vpack.c.b16 %v503, %v501
    %v614 = vpack.c.b16 %v506, %v504
    %v615 = vpack.c.b16 %v507, %v505
    %v616 = vpack.c.b16 %v510, %v508
    %v617 = vpack.c.b16 %v511, %v509
    %v618 = vpack.c.b16 %v514, %v512
    %v619 = vpack.c.b16 %v515, %v513
    %v620 = vpack.c.b16 %v518, %v516
    %v621 = vpack.c.b16 %v519, %v517
    %v622 = vpack.c.b16 %v522, %v520
    %v623 = vpack.c.b16 %v523, %v521
    %v624 = vpack.c.b16 %v526, %v524
    %v625 = vpack.c.b16 %v527, %v525
    %vm724 = vcmask 130048
    %v726 = vsel %vm724, %v129, 0
    %728 = vmatpush.bf16.msra.mxu0 %v542
    %729 = vmatpush.bf16.msra.mxu0 %v540
    %730 = vmatpush.bf16.msra.mxu0 %v538
    %731 = vmatpush.bf16.msra.mxu0 %v536
    %732 = vmatpush.bf16.msra.mxu0 %v534
    %733 = vmatpush.bf16.msra.mxu0 %v532
    %734 = vmatpush.bf16.msra.mxu0 %v530
    %735 = vmatpush.bf16.msra.mxu0 %v528
    %736 = vmatmul.bf16.gmra.mxu0 %v123
    %v737 = vpop.f32.mrf.mxu0
    %v738 = vadd.f32 %v230, %v737
    %v739 = vpop.f32.mrf.mxu0
    %740 = vdwg.mxu0
    %741 = vmatpush.bf16.msra.mxu0 %v558
    %742 = vmatpush.bf16.msra.mxu0 %v556
    %743 = vmatpush.bf16.msra.mxu0 %v554
    %744 = vmatpush.bf16.msra.mxu0 %v552
    %745 = vmatpush.bf16.msra.mxu0 %v550
    %746 = vmatpush.bf16.msra.mxu0 %v548
    %747 = vmatpush.bf16.msra.mxu0 %v546
    %748 = vmatpush.bf16.msra.mxu0 %v544
    %749 = vmatmul.bf16.gmra.mxu0 %v124
    %v750 = vpop.f32.mrf.mxu0
    %v751 = vadd.f32 %v738, %v750
    %v752 = vpop.f32.mrf.mxu0
    %753 = vdwg.mxu0
    %754 = vmatpush.bf16.msra.mxu0 %v574
    %755 = vmatpush.bf16.msra.mxu0 %v572
    %756 = vmatpush.bf16.msra.mxu0 %v570
    %757 = vmatpush.bf16.msra.mxu0 %v568
    %758 = vmatpush.bf16.msra.mxu0 %v566
    %759 = vmatpush.bf16.msra.mxu0 %v564
    %760 = vmatpush.bf16.msra.mxu0 %v562
    %761 = vmatpush.bf16.msra.mxu0 %v560
    %762 = vmatmul.bf16.gmra.mxu0 %v125
    %v763 = vpop.f32.mrf.mxu0
    %v764 = vadd.f32 %v751, %v763
    %v765 = vpop.f32.mrf.mxu0
    %766 = vdwg.mxu0
    %767 = vmatpush.bf16.msra.mxu0 %v590
    %768 = vmatpush.bf16.msra.mxu0 %v588
    %769 = vmatpush.bf16.msra.mxu0 %v586
    %770 = vmatpush.bf16.msra.mxu0 %v584
    %771 = vmatpush.bf16.msra.mxu0 %v582
    %772 = vmatpush.bf16.msra.mxu0 %v580
    %773 = vmatpush.bf16.msra.mxu0 %v578
    %774 = vmatpush.bf16.msra.mxu0 %v576
    %775 = vmatmul.bf16.gmra.mxu0 %v126
    %v776 = vpop.f32.mrf.mxu0
    %v777 = vadd.f32 %v764, %v776
    %v778 = vpop.f32.mrf.mxu0
    %779 = vdwg.mxu0
    %780 = vmatpush.bf16.msra.mxu0 %v606
    %781 = vmatpush.bf16.msra.mxu0 %v604
    %782 = vmatpush.bf16.msra.mxu0 %v602
    %783 = vmatpush.bf16.msra.mxu0 %v600
    %784 = vmatpush.bf16.msra.mxu0 %v598
    %785 = vmatpush.bf16.msra.mxu0 %v596
    %786 = vmatpush.bf16.msra.mxu0 %v594
    %787 = vmatpush.bf16.msra.mxu0 %v592
    %788 = vmatmul.bf16.gmra.mxu0 %v127
    %v789 = vpop.f32.mrf.mxu0
    %v790 = vadd.f32 %v777, %v789
    %v791 = vpop.f32.mrf.mxu0
    %792 = vdwg.mxu0
    %793 = vmatpush.bf16.msra.mxu0 %v622
    %794 = vmatpush.bf16.msra.mxu0 %v620
    %795 = vmatpush.bf16.msra.mxu0 %v618
    %796 = vmatpush.bf16.msra.mxu0 %v616
    %797 = vmatpush.bf16.msra.mxu0 %v614
    %798 = vmatpush.bf16.msra.mxu0 %v612
    %799 = vmatpush.bf16.msra.mxu0 %v610
    %800 = vmatpush.bf16.msra.mxu0 %v608
    %801 = vmatmul.bf16.gmra.mxu0 %v128
    %v802 = vpop.f32.mrf.mxu0
    %v803 = vadd.f32 %v790, %v802
    %v804 = vpop.f32.mrf.mxu0
    %805 = vdwg.mxu0
    %806 = vmatpush.bf16.msra.mxu0 0
    %807 = vmatpush.bf16.msra.mxu0 0
    %808 = vmatpush.bf16.msra.mxu0 0
    %809 = vmatpush.bf16.msra.mxu0 0
    %810 = vmatpush.bf16.msra.mxu0 0
    %811 = vmatpush.bf16.msra.mxu0 0
    %812 = vmatpush.bf16.msra.mxu0 0
    %813 = vmatpush.bf16.msra.mxu0 %v624
    %814 = vmatmul.bf16.gmra.mxu0 %v726
    %v815 = vpop.f32.mrf.mxu0
    %v816 = vadd.f32 %v803, %v815
    %v817 = vpop.f32.mrf.mxu0
    %818 = vdwg.mxu0
    %819 = vmatpush.bf16.msra.mxu0 %v543
    %820 = vmatpush.bf16.msra.mxu0 %v541
    %821 = vmatpush.bf16.msra.mxu0 %v539
    %822 = vmatpush.bf16.msra.mxu0 %v537
    %823 = vmatpush.bf16.msra.mxu0 %v535
    %824 = vmatpush.bf16.msra.mxu0 %v533
    %825 = vmatpush.bf16.msra.mxu0 %v531
    %826 = vmatpush.bf16.msra.mxu0 %v529
    %827 = vmatmul.bf16.gmra.mxu0 %v123
    %v828 = vpop.f32.mrf.mxu0
    %v829 = vadd.f32 %v231, %v828
    %v830 = vpop.f32.mrf.mxu0
    %831 = vdwg.mxu0
    %832 = vmatpush.bf16.msra.mxu0 %v559
    %833 = vmatpush.bf16.msra.mxu0 %v557
    %834 = vmatpush.bf16.msra.mxu0 %v555
    %835 = vmatpush.bf16.msra.mxu0 %v553
    %836 = vmatpush.bf16.msra.mxu0 %v551
    %837 = vmatpush.bf16.msra.mxu0 %v549
    %838 = vmatpush.bf16.msra.mxu0 %v547
    %839 = vmatpush.bf16.msra.mxu0 %v545
    %840 = vmatmul.bf16.gmra.mxu0 %v124
    %v841 = vpop.f32.mrf.mxu0
    %v842 = vadd.f32 %v829, %v841
    %v843 = vpop.f32.mrf.mxu0
    %844 = vdwg.mxu0
    %845 = vmatpush.bf16.msra.mxu0 %v575
    %846 = vmatpush.bf16.msra.mxu0 %v573
    %847 = vmatpush.bf16.msra.mxu0 %v571
    %848 = vmatpush.bf16.msra.mxu0 %v569
    %849 = vmatpush.bf16.msra.mxu0 %v567
    %850 = vmatpush.bf16.msra.mxu0 %v565
    %851 = vmatpush.bf16.msra.mxu0 %v563
    %852 = vmatpush.bf16.msra.mxu0 %v561
    %853 = vmatmul.bf16.gmra.mxu0 %v125
    %v854 = vpop.f32.mrf.mxu0
    %v855 = vadd.f32 %v842, %v854
    %v856 = vpop.f32.mrf.mxu0
    %857 = vdwg.mxu0
    %858 = vmatpush.bf16.msra.mxu0 %v591
    %859 = vmatpush.bf16.msra.mxu0 %v589
    %860 = vmatpush.bf16.msra.mxu0 %v587
    %861 = vmatpush.bf16.msra.mxu0 %v585
    %862 = vmatpush.bf16.msra.mxu0 %v583
    %863 = vmatpush.bf16.msra.mxu0 %v581
    %864 = vmatpush.bf16.msra.mxu0 %v579
    %865 = vmatpush.bf16.msra.mxu0 %v577
    %866 = vmatmul.bf16.gmra.mxu0 %v126
    %v867 = vpop.f32.mrf.mxu0
    %v868 = vadd.f32 %v855, %v867
    %v869 = vpop.f32.mrf.mxu0
    %870 = vdwg.mxu0
    %871 = vmatpush.bf16.msra.mxu0 %v607
    %872 = vmatpush.bf16.msra.mxu0 %v605
    %873 = vmatpush.bf16.msra.mxu0 %v603
    %874 = vmatpush.bf16.msra.mxu0 %v601
    %875 = vmatpush.bf16.msra.mxu0 %v599
    %876 = vmatpush.bf16.msra.mxu0 %v597
    %877 = vmatpush.bf16.msra.mxu0 %v595
    %878 = vmatpush.bf16.msra.mxu0 %v593
    %879 = vmatmul.bf16.gmra.mxu0 %v127
    %v880 = vpop.f32.mrf.mxu0
    %v881 = vadd.f32 %v868, %v880
    %v882 = vpop.f32.mrf.mxu0
    %883 = vdwg.mxu0
    %884 = vmatpush.bf16.msra.mxu0 %v623
    %885 = vmatpush.bf16.msra.mxu0 %v621
    %886 = vmatpush.bf16.msra.mxu0 %v619
    %887 = vmatpush.bf16.msra.mxu0 %v617
    %888 = vmatpush.bf16.msra.mxu0 %v615
    %889 = vmatpush.bf16.msra.mxu0 %v613
    %890 = vmatpush.bf16.msra.mxu0 %v611
    %891 = vmatpush.bf16.msra.mxu0 %v609
    %892 = vmatmul.bf16.gmra.mxu0 %v128
    %v893 = vpop.f32.mrf.mxu0
    %v894 = vadd.f32 %v881, %v893
    %v895 = vpop.f32.mrf.mxu0
    %896 = vdwg.mxu0
    %897 = vmatpush.bf16.msra.mxu0 0
    %898 = vmatpush.bf16.msra.mxu0 0
    %899 = vmatpush.bf16.msra.mxu0 0
    %900 = vmatpush.bf16.msra.mxu0 0
    %901 = vmatpush.bf16.msra.mxu0 0
    %902 = vmatpush.bf16.msra.mxu0 0
    %903 = vmatpush.bf16.msra.mxu0 0
    %904 = vmatpush.bf16.msra.mxu0 %v625
    %905 = vmatmul.bf16.gmra.mxu0 %v726
    %v906 = vpop.f32.mrf.mxu0
    %v907 = vadd.f32 %v894, %v906
    %v908 = vpop.f32.mrf.mxu0
    %909 = vdwg.mxu0
    %v910 = vmax.f32 %v816, 0.0
    %v911 = vmax.f32 %v907, 0.0
    %v912 = vpack.c.bf16 %v910, %v910
    %v913 = vpack.c.bf16 %v911, %v911
    %v914 = vld [vmem:[#allocation8] sm:$0xff]
    %v915 = vld [vmem:[#allocation8 + $0x8] sm:$0xff]
    %v916 = vld [vmem:[#allocation8 + $0x10] sm:$0xff]
    %v917 = vld [vmem:[#allocation8 + $0x18] sm:$0xff]
    %v918 = vld [vmem:[#allocation8 + $0x20] sm:$0xff]
    %v919 = vld [vmem:[#allocation8 + $0x28] sm:$0xff]
    %v920 = vld [vmem:[#allocation8 + $0x30] sm:$0xff]
    %v921 = vld [vmem:[#allocation8 + $0x38] sm:$0xff]
    %v922 = vld [vmem:[#allocation8 + $0x40] sm:$0xff]
    %v923 = vld [vmem:[#allocation8 + $0x48] sm:$0xff]
    %v924 = vld [vmem:[#allocation8 + $0x50] sm:$0xff]
    %v925 = vld [vmem:[#allocation8 + $0x58] sm:$0xff]
    %v926 = vld [vmem:[#allocation8 + $0x60] sm:$0xff]
    %v927 = vld [vmem:[#allocation8 + $0x68] sm:$0xff]
    %v928 = vld [vmem:[#allocation8 + $0x70] sm:$0xff]
    %v929 = vld [vmem:[#allocation8 + $0x78] sm:$0xff]
    %v930 = vld [vmem:[#allocation8 + $0x80] sm:$0xff]
    %v931 = vld [vmem:[#allocation8 + $0x88] sm:$0xff]
    %v932 = vld [vmem:[#allocation8 + $0x90] sm:$0xff]
    %v933 = vld [vmem:[#allocation8 + $0x98] sm:$0xff]
    %v934 = vld [vmem:[#allocation8 + $0xa0] sm:$0xff]
    %v935 = vld [vmem:[#allocation8 + $0xa8] sm:$0xff]
    %v936 = vld [vmem:[#allocation8 + $0xb0] sm:$0xff]
    %v937 = vld [vmem:[#allocation8 + $0xb8] sm:$0xff]
    %v938 = vld [vmem:[#allocation8 + $0xc0] sm:$0xff]
    %v939 = vld [vmem:[#allocation8 + $0xc8] sm:$0xff]
    %v940 = vld [vmem:[#allocation8 + $0xd0] sm:$0xff]
    %v941 = vld [vmem:[#allocation8 + $0xd8] sm:$0xff]
    %v942 = vld [vmem:[#allocation8 + $0xe0] sm:$0xff]
    %v943 = vld [vmem:[#allocation8 + $0xe8] sm:$0xff]
    %v944 = vld [vmem:[#allocation8 + $0xf0] sm:$0xff]
    %v945 = vld [vmem:[#allocation8 + $0xf8] sm:$0xff]
    %v946 = vld [vmem:[#allocation8 + $0x100] sm:$0xff]
    %v947 = vld [vmem:[#allocation8 + $0x108] sm:$0xff]
    %v948 = vld [vmem:[#allocation8 + $0x110] sm:$0xff]
    %v949 = vld [vmem:[#allocation8 + $0x118] sm:$0xff]
    %v950 = vld [vmem:[#allocation8 + $0x120] sm:$0xff]
    %v951 = vld [vmem:[#allocation8 + $0x128] sm:$0xff]
    %v952 = vld [vmem:[#allocation8 + $0x130] sm:$0xff]
    %v953 = vld [vmem:[#allocation8 + $0x138] sm:$0xff]
    %v954 = vld [vmem:[#allocation8 + $0x140] sm:$0xff]
    %v955 = vld [vmem:[#allocation8 + $0x148] sm:$0xff]
    %v956 = vld [vmem:[#allocation8 + $0x150] sm:$0xff]
    %v957 = vld [vmem:[#allocation8 + $0x158] sm:$0xff]
    %v958 = vld [vmem:[#allocation8 + $0x160] sm:$0xff]
    %v959 = vld [vmem:[#allocation8 + $0x168] sm:$0xff]
    %v960 = vld [vmem:[#allocation8 + $0x170] sm:$0xff]
    %v961 = vld [vmem:[#allocation8 + $0x178] sm:$0xff]
    %v962 = vld [vmem:[#allocation8 + $0x180] sm:$0xff]
    %v963 = vld [vmem:[#allocation8 + $0x188] sm:$0xff]
    %v964 = vld [vmem:[#allocation8 + $0x190] sm:$0xff]
    %v965 = vld [vmem:[#allocation8 + $0x198] sm:$0xff]
    %v966 = vld [vmem:[#allocation8 + $0x1a0] sm:$0xff]
    %v967 = vld [vmem:[#allocation8 + $0x1a8] sm:$0xff]
    %v968 = vld [vmem:[#allocation8 + $0x1b0] sm:$0xff]
    %v969 = vld [vmem:[#allocation8 + $0x1b8] sm:$0xff]
    %v970 = vld [vmem:[#allocation8 + $0x1c0] sm:$0xff]
    %v971 = vld [vmem:[#allocation8 + $0x1c8] sm:$0xff]
    %v972 = vld [vmem:[#allocation8 + $0x1d0] sm:$0xff]
    %v973 = vld [vmem:[#allocation8 + $0x1d8] sm:$0xff]
    %v974 = vld [vmem:[#allocation8 + $0x1e0] sm:$0xff]
    %v975 = vld [vmem:[#allocation8 + $0x1e8] sm:$0xff]
    %v976 = vld [vmem:[#allocation8 + $0x1f0] sm:$0xff]
    %v977 = vld [vmem:[#allocation8 + $0x1f8] sm:$0xff]
    %v978 = vld [vmem:[#allocation10] sm:$0xf]
    %v980 = vperm.slane %v978, 0
    %v981 = vperm.slane %v978, 1
    %v982 = vperm.slane %v978, 2
    %v983 = vperm.slane %v978, 3
    %v1052 = vunpack.c.l.b16 %v914
    %v1053 = vunpack.c.h.b16 %v914
    %v1054 = vunpack.c.l.b16 %v915
    %v1055 = vunpack.c.h.b16 %v915
    %v1056 = vunpack.c.l.b16 %v916
    %v1057 = vunpack.c.h.b16 %v916
    %v1058 = vunpack.c.l.b16 %v917
    %v1059 = vunpack.c.h.b16 %v917
    %v1060 = vunpack.c.l.b16 %v918
    %v1061 = vunpack.c.h.b16 %v918
    %v1062 = vunpack.c.l.b16 %v919
    %v1063 = vunpack.c.h.b16 %v919
    %v1064 = vunpack.c.l.b16 %v920
    %v1065 = vunpack.c.h.b16 %v920
    %v1066 = vunpack.c.l.b16 %v921
    %v1067 = vunpack.c.h.b16 %v921
    %v1068 = vunpack.c.l.b16 %v922
    %v1069 = vunpack.c.h.b16 %v922
    %v1070 = vunpack.c.l.b16 %v923
    %v1071 = vunpack.c.h.b16 %v923
    %v1072 = vunpack.c.l.b16 %v924
    %v1073 = vunpack.c.h.b16 %v924
    %v1074 = vunpack.c.l.b16 %v925
    %v1075 = vunpack.c.h.b16 %v925
    %v1076 = vunpack.c.l.b16 %v926
    %v1077 = vunpack.c.h.b16 %v926
    %v1078 = vunpack.c.l.b16 %v927
    %v1079 = vunpack.c.h.b16 %v927
    %v1080 = vunpack.c.l.b16 %v928
    %v1081 = vunpack.c.h.b16 %v928
    %v1082 = vunpack.c.l.b16 %v929
    %v1083 = vunpack.c.h.b16 %v929
    %v1084 = vunpack.c.l.b16 %v930
    %v1085 = vunpack.c.h.b16 %v930
    %v1086 = vunpack.c.l.b16 %v931
    %v1087 = vunpack.c.h.b16 %v931
    %v1088 = vunpack.c.l.b16 %v932
    %v1089 = vunpack.c.h.b16 %v932
    %v1090 = vunpack.c.l.b16 %v933
    %v1091 = vunpack.c.h.b16 %v933
    %v1092 = vunpack.c.l.b16 %v934
    %v1093 = vunpack.c.h.b16 %v934
    %v1094 = vunpack.c.l.b16 %v935
    %v1095 = vunpack.c.h.b16 %v935
    %v1096 = vunpack.c.l.b16 %v936
    %v1097 = vunpack.c.h.b16 %v936
    %v1098 = vunpack.c.l.b16 %v937
    %v1099 = vunpack.c.h.b16 %v937
    %v1100 = vunpack.c.l.b16 %v938
    %v1101 = vunpack.c.h.b16 %v938
    %v1102 = vunpack.c.l.b16 %v939
    %v1103 = vunpack.c.h.b16 %v939
    %v1104 = vunpack.c.l.b16 %v940
    %v1105 = vunpack.c.h.b16 %v940
    %v1106 = vunpack.c.l.b16 %v941
    %v1107 = vunpack.c.h.b16 %v941
    %v1108 = vunpack.c.l.b16 %v942
    %v1109 = vunpack.c.h.b16 %v942
    %v1110 = vunpack.c.l.b16 %v943
    %v1111 = vunpack.c.h.b16 %v943
    %v1112 = vunpack.c.l.b16 %v944
    %v1113 = vunpack.c.h.b16 %v944
    %v1114 = vunpack.c.l.b16 %v945
    %v1115 = vunpack.c.h.b16 %v945
    %v1116 = vunpack.c.l.b16 %v946
    %v1117 = vunpack.c.h.b16 %v946
    %v1118 = vunpack.c.l.b16 %v947
    %v1119 = vunpack.c.h.b16 %v947
    %v1120 = vunpack.c.l.b16 %v948
    %v1121 = vunpack.c.h.b16 %v948
    %v1122 = vunpack.c.l.b16 %v949
    %v1123 = vunpack.c.h.b16 %v949
    %v1124 = vunpack.c.l.b16 %v950
    %v1125 = vunpack.c.h.b16 %v950
    %v1126 = vunpack.c.l.b16 %v951
    %v1127 = vunpack.c.h.b16 %v951
    %v1128 = vunpack.c.l.b16 %v952
    %v1129 = vunpack.c.h.b16 %v952
    %v1130 = vunpack.c.l.b16 %v953
    %v1131 = vunpack.c.h.b16 %v953
    %v1132 = vunpack.c.l.b16 %v954
    %v1133 = vunpack.c.h.b16 %v954
    %v1134 = vunpack.c.l.b16 %v955
    %v1135 = vunpack.c.h.b16 %v955
    %v1136 = vunpack.c.l.b16 %v956
    %v1137 = vunpack.c.h.b16 %v956
    %v1138 = vunpack.c.l.b16 %v957
    %v1139 = vunpack.c.h.b16 %v957
    %v1140 = vunpack.c.l.b16 %v958
    %v1141 = vunpack.c.h.b16 %v958
    %v1142 = vunpack.c.l.b16 %v959
    %v1143 = vunpack.c.h.b16 %v959
    %v1144 = vunpack.c.l.b16 %v960
    %v1145 = vunpack.c.h.b16 %v960
    %v1146 = vunpack.c.l.b16 %v961
    %v1147 = vunpack.c.h.b16 %v961
    %v1148 = vunpack.c.l.b16 %v962
    %v1149 = vunpack.c.h.b16 %v962
    %v1150 = vunpack.c.l.b16 %v963
    %v1151 = vunpack.c.h.b16 %v963
    %v1152 = vunpack.c.l.b16 %v964
    %v1153 = vunpack.c.h.b16 %v964
    %v1154 = vunpack.c.l.b16 %v965
    %v1155 = vunpack.c.h.b16 %v965
    %v1156 = vunpack.c.l.b16 %v966
    %v1157 = vunpack.c.h.b16 %v966
    %v1158 = vunpack.c.l.b16 %v967
    %v1159 = vunpack.c.h.b16 %v967
    %v1160 = vunpack.c.l.b16 %v968
    %v1161 = vunpack.c.h.b16 %v968
    %v1162 = vunpack.c.l.b16 %v969
    %v1163 = vunpack.c.h.b16 %v969
    %v1164 = vunpack.c.l.b16 %v970
    %v1165 = vunpack.c.h.b16 %v970
    %v1166 = vunpack.c.l.b16 %v971
    %v1167 = vunpack.c.h.b16 %v971
    %v1168 = vunpack.c.l.b16 %v972
    %v1169 = vunpack.c.h.b16 %v972
    %v1170 = vunpack.c.l.b16 %v973
    %v1171 = vunpack.c.h.b16 %v973
    %v1172 = vunpack.c.l.b16 %v974
    %v1173 = vunpack.c.h.b16 %v974
    %v1174 = vunpack.c.l.b16 %v975
    %v1175 = vunpack.c.h.b16 %v975
    %v1176 = vunpack.c.l.b16 %v976
    %v1177 = vunpack.c.h.b16 %v976
    %v1178 = vunpack.c.l.b16 %v977
    %v1179 = vunpack.c.h.b16 %v977
    %v1180 = vpack.c.b16 %v1056, %v1052
    %v1181 = vpack.c.b16 %v1057, %v1053
    %v1182 = vpack.c.b16 %v1058, %v1054
    %v1183 = vpack.c.b16 %v1059, %v1055
    %v1184 = vpack.c.b16 %v1064, %v1060
    %v1185 = vpack.c.b16 %v1065, %v1061
    %v1186 = vpack.c.b16 %v1066, %v1062
    %v1187 = vpack.c.b16 %v1067, %v1063
    %v1188 = vpack.c.b16 %v1072, %v1068
    %v1189 = vpack.c.b16 %v1073, %v1069
    %v1190 = vpack.c.b16 %v1074, %v1070
    %v1191 = vpack.c.b16 %v1075, %v1071
    %v1192 = vpack.c.b16 %v1080, %v1076
    %v1193 = vpack.c.b16 %v1081, %v1077
    %v1194 = vpack.c.b16 %v1082, %v1078
    %v1195 = vpack.c.b16 %v1083, %v1079
    %v1196 = vpack.c.b16 %v1088, %v1084
    %v1197 = vpack.c.b16 %v1089, %v1085
    %v1198 = vpack.c.b16 %v1090, %v1086
    %v1199 = vpack.c.b16 %v1091, %v1087
    %v1200 = vpack.c.b16 %v1096, %v1092
    %v1201 = vpack.c.b16 %v1097, %v1093
    %v1202 = vpack.c.b16 %v1098, %v1094
    %v1203 = vpack.c.b16 %v1099, %v1095
    %v1204 = vpack.c.b16 %v1104, %v1100
    %v1205 = vpack.c.b16 %v1105, %v1101
    %v1206 = vpack.c.b16 %v1106, %v1102
    %v1207 = vpack.c.b16 %v1107, %v1103
    %v1208 = vpack.c.b16 %v1112, %v1108
    %v1209 = vpack.c.b16 %v1113, %v1109
    %v1210 = vpack.c.b16 %v1114, %v1110
    %v1211 = vpack.c.b16 %v1115, %v1111
    %v1212 = vpack.c.b16 %v1120, %v1116
    %v1213 = vpack.c.b16 %v1121, %v1117
    %v1214 = vpack.c.b16 %v1122, %v1118
    %v1215 = vpack.c.b16 %v1123, %v1119
    %v1216 = vpack.c.b16 %v1128, %v1124
    %v1217 = vpack.c.b16 %v1129, %v1125
    %v1218 = vpack.c.b16 %v1130, %v1126
    %v1219 = vpack.c.b16 %v1131, %v1127
    %v1220 = vpack.c.b16 %v1136, %v1132
    %v1221 = vpack.c.b16 %v1137, %v1133
    %v1222 = vpack.c.b16 %v1138, %v1134
    %v1223 = vpack.c.b16 %v1139, %v1135
    %v1224 = vpack.c.b16 %v1144, %v1140
    %v1225 = vpack.c.b16 %v1145, %v1141
    %v1226 = vpack.c.b16 %v1146, %v1142
    %v1227 = vpack.c.b16 %v1147, %v1143
    %v1228 = vpack.c.b16 %v1152, %v1148
    %v1229 = vpack.c.b16 %v1153, %v1149
    %v1230 = vpack.c.b16 %v1154, %v1150
    %v1231 = vpack.c.b16 %v1155, %v1151
    %v1232 = vpack.c.b16 %v1160, %v1156
    %v1233 = vpack.c.b16 %v1161, %v1157
    %v1234 = vpack.c.b16 %v1162, %v1158
    %v1235 = vpack.c.b16 %v1163, %v1159
    %v1236 = vpack.c.b16 %v1168, %v1164
    %v1237 = vpack.c.b16 %v1169, %v1165
    %v1238 = vpack.c.b16 %v1170, %v1166
    %v1239 = vpack.c.b16 %v1171, %v1167
    %v1240 = vpack.c.b16 %v1176, %v1172
    %v1241 = vpack.c.b16 %v1177, %v1173
    %v1242 = vpack.c.b16 %v1178, %v1174
    %v1243 = vpack.c.b16 %v1179, %v1175
    %1308 = vmatpush.bf16.msra.mxu0 %v1208
    %1309 = vmatpush.bf16.msra.mxu0 %v1204
    %1310 = vmatpush.bf16.msra.mxu0 %v1200
    %1311 = vmatpush.bf16.msra.mxu0 %v1196
    %1312 = vmatpush.bf16.msra.mxu0 %v1192
    %1313 = vmatpush.bf16.msra.mxu0 %v1188
    %1314 = vmatpush.bf16.msra.mxu0 %v1184
    %1315 = vmatpush.bf16.msra.mxu0 %v1180
    %1316 = vmatmul.bf16.gmra.mxu0 %v912
    %v1317 = vpop.f32.mrf.mxu0
    %v1318 = vadd.f32 %v980, %v1317
    %v1319 = vpop.f32.mrf.mxu0
    %1320 = vdwg.mxu0
    %1321 = vmatpush.bf16.msra.mxu0 %v1240
    %1322 = vmatpush.bf16.msra.mxu0 %v1236
    %1323 = vmatpush.bf16.msra.mxu0 %v1232
    %1324 = vmatpush.bf16.msra.mxu0 %v1228
    %1325 = vmatpush.bf16.msra.mxu0 %v1224
    %1326 = vmatpush.bf16.msra.mxu0 %v1220
    %1327 = vmatpush.bf16.msra.mxu0 %v1216
    %1328 = vmatpush.bf16.msra.mxu0 %v1212
    %1329 = vmatmul.bf16.gmra.mxu0 %v913
    %v1330 = vpop.f32.mrf.mxu0
    %v1331 = vadd.f32 %v1318, %v1330
    %v1332 = vpop.f32.mrf.mxu0
    %1333 = vdwg.mxu0
    %1334 = vmatpush.bf16.msra.mxu0 %v1209
    %1335 = vmatpush.bf16.msra.mxu0 %v1205
    %1336 = vmatpush.bf16.msra.mxu0 %v1201
    %1337 = vmatpush.bf16.msra.mxu0 %v1197
    %1338 = vmatpush.bf16.msra.mxu0 %v1193
    %1339 = vmatpush.bf16.msra.mxu0 %v1189
    %1340 = vmatpush.bf16.msra.mxu0 %v1185
    %1341 = vmatpush.bf16.msra.mxu0 %v1181
    %1342 = vmatmul.bf16.gmra.mxu0 %v912
    %v1343 = vpop.f32.mrf.mxu0
    %v1344 = vadd.f32 %v981, %v1343
    %v1345 = vpop.f32.mrf.mxu0
    %1346 = vdwg.mxu0
    %1347 = vmatpush.bf16.msra.mxu0 %v1241
    %1348 = vmatpush.bf16.msra.mxu0 %v1237
    %1349 = vmatpush.bf16.msra.mxu0 %v1233
    %1350 = vmatpush.bf16.msra.mxu0 %v1229
    %1351 = vmatpush.bf16.msra.mxu0 %v1225
    %1352 = vmatpush.bf16.msra.mxu0 %v1221
    %1353 = vmatpush.bf16.msra.mxu0 %v1217
    %1354 = vmatpush.bf16.msra.mxu0 %v1213
    %1355 = vmatmul.bf16.gmra.mxu0 %v913
    %v1356 = vpop.f32.mrf.mxu0
    %v1357 = vadd.f32 %v1344, %v1356
    %v1358 = vpop.f32.mrf.mxu0
    %1359 = vdwg.mxu0
    %1360 = vmatpush.bf16.msra.mxu0 %v1210
    %1361 = vmatpush.bf16.msra.mxu0 %v1206
    %1362 = vmatpush.bf16.msra.mxu0 %v1202
    %1363 = vmatpush.bf16.msra.mxu0 %v1198
    %1364 = vmatpush.bf16.msra.mxu0 %v1194
    %1365 = vmatpush.bf16.msra.mxu0 %v1190
    %1366 = vmatpush.bf16.msra.mxu0 %v1186
    %1367 = vmatpush.bf16.msra.mxu0 %v1182
    %1368 = vmatmul.bf16.gmra.mxu0 %v912
    %v1369 = vpop.f32.mrf.mxu0
    %v1370 = vadd.f32 %v982, %v1369
    %v1371 = vpop.f32.mrf.mxu0
    %1372 = vdwg.mxu0
    %1373 = vmatpush.bf16.msra.mxu0 %v1242
    %1374 = vmatpush.bf16.msra.mxu0 %v1238
    %1375 = vmatpush.bf16.msra.mxu0 %v1234
    %1376 = vmatpush.bf16.msra.mxu0 %v1230
    %1377 = vmatpush.bf16.msra.mxu0 %v1226
    %1378 = vmatpush.bf16.msra.mxu0 %v1222
    %1379 = vmatpush.bf16.msra.mxu0 %v1218
    %1380 = vmatpush.bf16.msra.mxu0 %v1214
    %1381 = vmatmul.bf16.gmra.mxu0 %v913
    %v1382 = vpop.f32.mrf.mxu0
    %v1383 = vadd.f32 %v1370, %v1382
    %v1384 = vpop.f32.mrf.mxu0
    %1385 = vdwg.mxu0
    %1386 = vmatpush.bf16.msra.mxu0 %v1211
    %1387 = vmatpush.bf16.msra.mxu0 %v1207
    %1388 = vmatpush.bf16.msra.mxu0 %v1203
    %1389 = vmatpush.bf16.msra.mxu0 %v1199
    %1390 = vmatpush.bf16.msra.mxu0 %v1195
    %1391 = vmatpush.bf16.msra.mxu0 %v1191
    %1392 = vmatpush.bf16.msra.mxu0 %v1187
    %1393 = vmatpush.bf16.msra.mxu0 %v1183
    %1394 = vmatmul.bf16.gmra.mxu0 %v912
    %v1395 = vpop.f32.mrf.mxu0
    %v1396 = vadd.f32 %v983, %v1395
    %v1397 = vpop.f32.mrf.mxu0
    %1398 = vdwg.mxu0
    %1399 = vmatpush.bf16.msra.mxu0 %v1243
    %1400 = vmatpush.bf16.msra.mxu0 %v1239
    %1401 = vmatpush.bf16.msra.mxu0 %v1235
    %1402 = vmatpush.bf16.msra.mxu0 %v1231
    %1403 = vmatpush.bf16.msra.mxu0 %v1227
    %1404 = vmatpush.bf16.msra.mxu0 %v1223
    %1405 = vmatpush.bf16.msra.mxu0 %v1219
    %1406 = vmatpush.bf16.msra.mxu0 %v1215
    %1407 = vmatmul.bf16.gmra.mxu0 %v913
    %v1408 = vpop.f32.mrf.mxu0
    %v1409 = vadd.f32 %v1396, %v1408
    %v1410 = vpop.f32.mrf.mxu0
    %1411 = vdwg.mxu0
    %v1412 = vmax.f32 %v1331, 0.0
    %v1413 = vmax.f32 %v1357, 0.0
    %v1414 = vmax.f32 %v1383, 0.0
    %v1415 = vmax.f32 %v1409, 0.0
    %v1416 = vpack.c.bf16 %v1412, %v1412
    %v1417 = vpack.c.bf16 %v1413, %v1413
    %v1418 = vpack.c.bf16 %v1414, %v1414
    %v1419 = vpack.c.bf16 %v1415, %v1415
    %v1420 = vld [vmem:[#allocation11] sm:$0xf]
    %v1421 = vld [vmem:[#allocation11 + $0x4] sm:$0xf]
    %v1422 = vld [vmem:[#allocation11 + $0x8] sm:$0xf]
    %v1423 = vld [vmem:[#allocation11 + $0xc] sm:$0xf]
    %v1424 = vld [vmem:[#allocation11 + $0x10] sm:$0xf]
    %v1425 = vld [vmem:[#allocation11 + $0x14] sm:$0xf]
    %v1426 = vld [vmem:[#allocation11 + $0x18] sm:$0xf]
    %v1427 = vld [vmem:[#allocation11 + $0x1c] sm:$0xf]
    %v1428 = vld [vmem:[#allocation11 + $0x20] sm:$0xf]
    %v1429 = vld [vmem:[#allocation11 + $0x24] sm:$0xf]
    %v1430 = vld [vmem:[#allocation11 + $0x28] sm:$0xf]
    %v1431 = vld [vmem:[#allocation11 + $0x2c] sm:$0xf]
    %v1432 = vld [vmem:[#allocation11 + $0x30] sm:$0xf]
    %v1433 = vld [vmem:[#allocation11 + $0x34] sm:$0xf]
    %v1434 = vld [vmem:[#allocation11 + $0x38] sm:$0xf]
    %v1435 = vld [vmem:[#allocation11 + $0x3c] sm:$0xf]
    %v1436 = vld [vmem:[#allocation11 + $0x40] sm:$0xf]
    %v1437 = vld [vmem:[#allocation11 + $0x44] sm:$0xf]
    %v1438 = vld [vmem:[#allocation11 + $0x48] sm:$0xf]
    %v1439 = vld [vmem:[#allocation11 + $0x4c] sm:$0xf]
    %v1440 = vld [vmem:[#allocation11 + $0x50] sm:$0xf]
    %v1441 = vld [vmem:[#allocation11 + $0x54] sm:$0xf]
    %v1442 = vld [vmem:[#allocation11 + $0x58] sm:$0xf]
    %v1443 = vld [vmem:[#allocation11 + $0x5c] sm:$0xf]
    %v1444 = vld [vmem:[#allocation11 + $0x60] sm:$0xf]
    %v1445 = vld [vmem:[#allocation11 + $0x64] sm:$0xf]
    %v1446 = vld [vmem:[#allocation11 + $0x68] sm:$0xf]
    %v1447 = vld [vmem:[#allocation11 + $0x6c] sm:$0xf]
    %v1448 = vld [vmem:[#allocation11 + $0x70] sm:$0xf]
    %v1449 = vld [vmem:[#allocation11 + $0x74] sm:$0xf]
    %v1450 = vld [vmem:[#allocation11 + $0x78] sm:$0xf]
    %v1451 = vld [vmem:[#allocation11 + $0x7c] sm:$0xf]
    %v1452 = vld [vmem:[#allocation11 + $0x80] sm:$0xf]
    %v1453 = vld [vmem:[#allocation11 + $0x84] sm:$0xf]
    %v1454 = vld [vmem:[#allocation11 + $0x88] sm:$0xf]
    %v1455 = vld [vmem:[#allocation11 + $0x8c] sm:$0xf]
    %v1456 = vld [vmem:[#allocation11 + $0x90] sm:$0xf]
    %v1457 = vld [vmem:[#allocation11 + $0x94] sm:$0xf]
    %v1458 = vld [vmem:[#allocation11 + $0x98] sm:$0xf]
    %v1459 = vld [vmem:[#allocation11 + $0x9c] sm:$0xf]
    %v1460 = vld [vmem:[#allocation11 + $0xa0] sm:$0xf]
    %v1461 = vld [vmem:[#allocation11 + $0xa4] sm:$0xf]
    %v1462 = vld [vmem:[#allocation11 + $0xa8] sm:$0xf]
    %v1463 = vld [vmem:[#allocation11 + $0xac] sm:$0xf]
    %v1464 = vld [vmem:[#allocation11 + $0xb0] sm:$0xf]
    %v1465 = vld [vmem:[#allocation11 + $0xb4] sm:$0xf]
    %v1466 = vld [vmem:[#allocation11 + $0xb8] sm:$0xf]
    %v1467 = vld [vmem:[#allocation11 + $0xbc] sm:$0xf]
    %v1468 = vld [vmem:[#allocation11 + $0xc0] sm:$0xf]
    %v1469 = vld [vmem:[#allocation11 + $0xc4] sm:$0xf]
    %v1470 = vld [vmem:[#allocation11 + $0xc8] sm:$0xf]
    %v1471 = vld [vmem:[#allocation11 + $0xcc] sm:$0xf]
    %v1472 = vld [vmem:[#allocation11 + $0xd0] sm:$0xf]
    %v1473 = vld [vmem:[#allocation11 + $0xd4] sm:$0xf]
    %v1474 = vld [vmem:[#allocation11 + $0xd8] sm:$0xf]
    %v1475 = vld [vmem:[#allocation11 + $0xdc] sm:$0xf]
    %v1476 = vld [vmem:[#allocation11 + $0xe0] sm:$0xf]
    %v1477 = vld [vmem:[#allocation11 + $0xe4] sm:$0xf]
    %v1478 = vld [vmem:[#allocation11 + $0xe8] sm:$0xf]
    %v1479 = vld [vmem:[#allocation11 + $0xec] sm:$0xf]
    %v1480 = vld [vmem:[#allocation11 + $0xf0] sm:$0xf]
    %v1481 = vld [vmem:[#allocation11 + $0xf4] sm:$0xf]
    %v1482 = vld [vmem:[#allocation11 + $0xf8] sm:$0xf]
    %v1483 = vld [vmem:[#allocation11 + $0xfc] sm:$0xf]
    %v1484 = vld [vmem:[%s6] sm:$0x1]
    %v1486 = vperm.slane %v1484, 0
    %v1552 = vunpack.c.l.b16 %v1420
    %v1553 = vunpack.c.l.b16 %v1421
    %v1554 = vunpack.c.l.b16 %v1422
    %v1555 = vunpack.c.l.b16 %v1423
    %v1556 = vunpack.c.l.b16 %v1424
    %v1557 = vunpack.c.l.b16 %v1425
    %v1558 = vunpack.c.l.b16 %v1426
    %v1559 = vunpack.c.l.b16 %v1427
    %v1560 = vunpack.c.l.b16 %v1428
    %v1561 = vunpack.c.l.b16 %v1429
    %v1562 = vunpack.c.l.b16 %v1430
    %v1563 = vunpack.c.l.b16 %v1431
    %v1564 = vunpack.c.l.b16 %v1432
    %v1565 = vunpack.c.l.b16 %v1433
    %v1566 = vunpack.c.l.b16 %v1434
    %v1567 = vunpack.c.l.b16 %v1435
    %v1568 = vunpack.c.l.b16 %v1436
    %v1569 = vunpack.c.l.b16 %v1437
    %v1570 = vunpack.c.l.b16 %v1438
    %v1571 = vunpack.c.l.b16 %v1439
    %v1572 = vunpack.c.l.b16 %v1440
    %v1573 = vunpack.c.l.b16 %v1441
    %v1574 = vunpack.c.l.b16 %v1442
    %v1575 = vunpack.c.l.b16 %v1443
    %v1576 = vunpack.c.l.b16 %v1444
    %v1577 = vunpack.c.l.b16 %v1445
    %v1578 = vunpack.c.l.b16 %v1446
    %v1579 = vunpack.c.l.b16 %v1447
    %v1580 = vunpack.c.l.b16 %v1448
    %v1581 = vunpack.c.l.b16 %v1449
    %v1582 = vunpack.c.l.b16 %v1450
    %v1583 = vunpack.c.l.b16 %v1451
    %v1584 = vunpack.c.l.b16 %v1452
    %v1585 = vunpack.c.l.b16 %v1453
    %v1586 = vunpack.c.l.b16 %v1454
    %v1587 = vunpack.c.l.b16 %v1455
    %v1588 = vunpack.c.l.b16 %v1456
    %v1589 = vunpack.c.l.b16 %v1457
    %v1590 = vunpack.c.l.b16 %v1458
    %v1591 = vunpack.c.l.b16 %v1459
    %v1592 = vunpack.c.l.b16 %v1460
    %v1593 = vunpack.c.l.b16 %v1461
    %v1594 = vunpack.c.l.b16 %v1462
    %v1595 = vunpack.c.l.b16 %v1463
    %v1596 = vunpack.c.l.b16 %v1464
    %v1597 = vunpack.c.l.b16 %v1465
    %v1598 = vunpack.c.l.b16 %v1466
    %v1599 = vunpack.c.l.b16 %v1467
    %v1600 = vunpack.c.l.b16 %v1468
    %v1601 = vunpack.c.l.b16 %v1469
    %v1602 = vunpack.c.l.b16 %v1470
    %v1603 = vunpack.c.l.b16 %v1471
    %v1604 = vunpack.c.l.b16 %v1472
    %v1605 = vunpack.c.l.b16 %v1473
    %v1606 = vunpack.c.l.b16 %v1474
    %v1607 = vunpack.c.l.b16 %v1475
    %v1608 = vunpack.c.l.b16 %v1476
    %v1609 = vunpack.c.l.b16 %v1477
    %v1610 = vunpack.c.l.b16 %v1478
    %v1611 = vunpack.c.l.b16 %v1479
    %v1612 = vunpack.c.l.b16 %v1480
    %v1613 = vunpack.c.l.b16 %v1481
    %v1614 = vunpack.c.l.b16 %v1482
    %v1615 = vunpack.c.l.b16 %v1483
    %v1616 = vpack.c.b16 %v1553, %v1552
    %v1617 = vpack.c.b16 %v1555, %v1554
    %v1618 = vpack.c.b16 %v1557, %v1556
    %v1619 = vpack.c.b16 %v1559, %v1558
    %v1620 = vpack.c.b16 %v1561, %v1560
    %v1621 = vpack.c.b16 %v1563, %v1562
    %v1622 = vpack.c.b16 %v1565, %v1564
    %v1623 = vpack.c.b16 %v1567, %v1566
    %v1624 = vpack.c.b16 %v1569, %v1568
    %v1625 = vpack.c.b16 %v1571, %v1570
    %v1626 = vpack.c.b16 %v1573, %v1572
    %v1627 = vpack.c.b16 %v1575, %v1574
    %v1628 = vpack.c.b16 %v1577, %v1576
    %v1629 = vpack.c.b16 %v1579, %v1578
    %v1630 = vpack.c.b16 %v1581, %v1580
    %v1631 = vpack.c.b16 %v1583, %v1582
    %v1632 = vpack.c.b16 %v1585, %v1584
    %v1633 = vpack.c.b16 %v1587, %v1586
    %v1634 = vpack.c.b16 %v1589, %v1588
    %v1635 = vpack.c.b16 %v1591, %v1590
    %v1636 = vpack.c.b16 %v1593, %v1592
    %v1637 = vpack.c.b16 %v1595, %v1594
    %v1638 = vpack.c.b16 %v1597, %v1596
    %v1639 = vpack.c.b16 %v1599, %v1598
    %v1640 = vpack.c.b16 %v1601, %v1600
    %v1641 = vpack.c.b16 %v1603, %v1602
    %v1642 = vpack.c.b16 %v1605, %v1604
    %v1643 = vpack.c.b16 %v1607, %v1606
    %v1644 = vpack.c.b16 %v1609, %v1608
    %v1645 = vpack.c.b16 %v1611, %v1610
    %v1646 = vpack.c.b16 %v1613, %v1612
    %v1647 = vpack.c.b16 %v1615, %v1614
    %1680 = vmatpush.bf16.msra.mxu0 %v1623
    %1681 = vmatpush.bf16.msra.mxu0 %v1622
    %1682 = vmatpush.bf16.msra.mxu0 %v1621
    %1683 = vmatpush.bf16.msra.mxu0 %v1620
    %1684 = vmatpush.bf16.msra.mxu0 %v1619
    %1685 = vmatpush.bf16.msra.mxu0 %v1618
    %1686 = vmatpush.bf16.msra.mxu0 %v1617
    %1687 = vmatpush.bf16.msra.mxu0 %v1616
    %1688 = vmatmul.bf16.gmra.mxu0 %v1416
    %v1689 = vpop.f32.mrf.mxu0
    %v1690 = vadd.f32 %v1486, %v1689
    %v1691 = vpop.f32.mrf.mxu0
    %1692 = vdwg.mxu0
    %1693 = vmatpush.bf16.msra.mxu0 %v1631
    %1694 = vmatpush.bf16.msra.mxu0 %v1630
    %1695 = vmatpush.bf16.msra.mxu0 %v1629
    %1696 = vmatpush.bf16.msra.mxu0 %v1628
    %1697 = vmatpush.bf16.msra.mxu0 %v1627
    %1698 = vmatpush.bf16.msra.mxu0 %v1626
    %1699 = vmatpush.bf16.msra.mxu0 %v1625
    %1700 = vmatpush.bf16.msra.mxu0 %v1624
    %1701 = vmatmul.bf16.gmra.mxu0 %v1417
    %v1702 = vpop.f32.mrf.mxu0
    %v1703 = vadd.f32 %v1690, %v1702
    %v1704 = vpop.f32.mrf.mxu0
    %1705 = vdwg.mxu0
    %1706 = vmatpush.bf16.msra.mxu0 %v1639
    %1707 = vmatpush.bf16.msra.mxu0 %v1638
    %1708 = vmatpush.bf16.msra.mxu0 %v1637
    %1709 = vmatpush.bf16.msra.mxu0 %v1636
    %1710 = vmatpush.bf16.msra.mxu0 %v1635
    %1711 = vmatpush.bf16.msra.mxu0 %v1634
    %1712 = vmatpush.bf16.msra.mxu0 %v1633
    %1713 = vmatpush.bf16.msra.mxu0 %v1632
    %1714 = vmatmul.bf16.gmra.mxu0 %v1418
    %v1715 = vpop.f32.mrf.mxu0
    %v1716 = vadd.f32 %v1703, %v1715
    %v1717 = vpop.f32.mrf.mxu0
    %1718 = vdwg.mxu0
    %1719 = vmatpush.bf16.msra.mxu0 %v1647
    %1720 = vmatpush.bf16.msra.mxu0 %v1646
    %1721 = vmatpush.bf16.msra.mxu0 %v1645
    %1722 = vmatpush.bf16.msra.mxu0 %v1644
    %1723 = vmatpush.bf16.msra.mxu0 %v1643
    %1724 = vmatpush.bf16.msra.mxu0 %v1642
    %1725 = vmatpush.bf16.msra.mxu0 %v1641
    %1726 = vmatpush.bf16.msra.mxu0 %v1640
    %1727 = vmatmul.bf16.gmra.mxu0 %v1419
    %v1728 = vpop.f32.mrf.mxu0
    %v1729 = vadd.f32 %v1716, %v1728
    %v1730 = vpop.f32.mrf.mxu0
    %1731 = vdwg.mxu0
    %v1732 = vpack.c.bf16 %v1729, %v1729
    %1733 = vst [vmem:[#allocation13] sm:$0xf] %v1732
    // Predicated region
    $region54: #{tpu_custom_call.1} parent=1 // pred_check
      _
    $region55: #{tpu_custom_call.1} parent=1 // pred_check_branch
      %1735 = sbr.rel (0) target = $region57
    $region56: #{tpu_custom_call.1} parent=1 // pred_region
      %1737 = vsyncadd [#allocation4], 0
      %s1739 = sshll.u32 [#allocation13], 4
      %s1740 = int_to_ptr.vmem [resolvable:$true] %s1739
      %s1741 = sshll.u32 %s7, 4
      %s1742 = int_to_ptr.hbm [resolvable:$true] %s1741
      %1744 = dma.vmem_to_hbm [thread:$0]  %s1740, 64, %s1742, [#allocation4]
    $region57: #{tpu_custom_call.1} parent=1 // pred_fallthru
      _
    // Predicated region
    $region58: #{tpu_custom_call.1} parent=1 // pred_check
      _
    $region59: #{tpu_custom_call.1} parent=1 // pred_check_branch
      %1746 = sbr.rel (0) target = $region61
    $region60: #{tpu_custom_call.1} parent=1 // pred_region
      %1748 = dma.done [#allocation4], 64
    $region61: #{tpu_custom_call.1} parent=1 // pred_fallthru
      _
    %1749 = vsyncpa [#allocation3], 1
    %1750 = vsyncpa [#allocation6], 1
    %1751 = vsyncpa [#allocation9], 1
    %1752 = vsyncpa [#allocation12], 1
    %1753 = vsyncpa [#allocation4], 1

</llo_original>
